<compile_context>
chip_gen: v5e
topology: v5e:2x2
jax: 0.10.0
libtpu: 0.0.40
codegen_flags: <defaults>
</compile_context>

<pallas_src>
import functools
import math

import jax
import jax.numpy as jnp
from jax.experimental import pallas as pl
from jax.experimental.pallas import tpu as pltpu

LN_EPS = 1e-5                 # PyTorch nn.LayerNorm default
_ACT_DTYPE = jnp.bfloat16     # inter-kernel activations
_W_DTYPE = jnp.bfloat16       # matmul weights (biases / LN params stay f32)
_GELU_APPROX = True           # tanh gelu -> EUP slot (erf gelu = VPU polynomial)


# --------------------------- hardware-aware sizing -------------------------

def _phys_vmem_bytes():
    try:
        info = pltpu.get_tpu_info()
    except Exception:
        return 64 * 1024 * 1024
    for attr in ("vmem_capacity_bytes", "vmem_bytes", "vmem_size_bytes"):
        try:
            v = int(getattr(info, attr))
        except (AttributeError, TypeError, ValueError):
            continue
        if v > 0:
            return v
    return 64 * 1024 * 1024


_PHYS_VMEM = _phys_vmem_bytes()
# ~48 MiB scoped limit on v7x (64 MiB phys), ~96 MiB on v5e/v6e (128 MiB phys).
_VMEM_LIMIT = max(32 * 1024 * 1024,
                  min((_PHYS_VMEM * 3) // 4, 96 * 1024 * 1024))
_BIG_VMEM = _PHYS_VMEM >= 100 * 1024 * 1024


def _tile_m(M):
    # 512-row tiles (16-aligned for bf16 sublane packing) on 64-MiB chips,
    # 1024 on 128-MiB chips; single block when the whole M fits.
    cap = 1024 if _BIG_VMEM else 512
    return M if M <= cap else cap


def _tile_n(N):
    # Stream wide output / weight columns in 2048-lane chunks.
    return N if N <= 2048 else 2048


def _seq_tile(T, cap):
    # Largest multiple-of-16 divisor of T that is <= cap (exact tiling keeps
    # padded-garbage keys out of the softmax); full T when none exists.
    if T <= cap:
        return T
    t = cap - (cap % 16)
    while t >= 16:
        if T % t == 0:
            return t
        t -= 16
    return T


# ----------------------------- Pallas kernels ------------------------------

def _linear_kernel(x_ref, w_ref, b_ref, o_ref, *, activation):
    # y = x @ w + b (optionally gelu); bf16 MXU inputs, f32 accumulation.
    y = jnp.dot(x_ref[...], w_ref[...], preferred_element_type=jnp.float32)
    y = y + b_ref[...]
    if activation == "gelu":
        y = jax.nn.gelu(y, approximate=_GELU_APPROX)
    o_ref[...] = y.astype(o_ref.dtype)


def linear(x, w, b, activation=None):
    # x: [M, K] bf16, w: [K, N] bf16 (pre-transposed vs. torch), b: [N] f32
    M, K = x.shape
    N = w.shape[1]
    tm = _tile_m(M)
    tn = _tile_n(N)
    kern = functools.partial(_linear_kernel, activation=activation)
    cost = pl.CostEstimate(
        flops=2 * M * K * N,
        transcendentals=(M * N) if activation == "gelu" else 0,
        bytes_accessed=(M * K + K * N + M * N) * 2 + N * 4)
    return pl.pallas_call(
        kern,
        out_shape=jax.ShapeDtypeStruct((M, N), x.dtype),
        grid=(pl.cdiv(M, tm), pl.cdiv(N, tn)),
        in_specs=[
            pl.BlockSpec((tm, K), lambda i, j: (i, 0)),   # activations stream
            pl.BlockSpec((K, tn), lambda i, j: (0, j)),   # weight column tile
            pl.BlockSpec((1, tn), lambda i, j: (0, j)),
        ],
        out_specs=pl.BlockSpec((tm, tn), lambda i, j: (i, j)),
        compiler_params=pltpu.CompilerParams(
            dimension_semantics=("parallel", "parallel"),
            vmem_limit_bytes=_VMEM_LIMIT),
        cost_estimate=cost,
    )(x, w, b.reshape(1, N))


def _proj_add_ln_kernel(x_ref, r_ref, w_ref, b_ref, g_ref, bt_ref, o_ref):
    # Fused post-norm epilogue: LayerNorm((x @ W + b) + residual) * gamma + beta
    y = jnp.dot(x_ref[...], w_ref[...], preferred_element_type=jnp.float32)
    y = y + b_ref[...] + r_ref[...].astype(jnp.float32)
    mean = jnp.mean(y, axis=-1, keepdims=True)
    var = jnp.mean(jnp.square(y - mean), axis=-1, keepdims=True)
    y = (y - mean) * jax.lax.rsqrt(var + LN_EPS)
    o_ref[...] = (y * g_ref[...] + bt_ref[...]).astype(o_ref.dtype)


def proj_add_ln(x, resid, w, b, gamma, beta):
    # x: [M, K] bf16, resid: [M, D] bf16, w: [K, D] bf16.  LN needs the full D
    # axis per row, so only M is tiled; the bf16 (K, D) weight stays well under
    # the scoped VMEM limit at production widths (8 MiB at K=4096, D=1024).
    # TODO(synk): add a K-reduction grid axis + f32 accumulator if d_inner
    # grows beyond ~8k on v7x.
    M, K = x.shape
    D = w.shape[1]
    tm = _tile_m(M)
    cost = pl.CostEstimate(
        flops=2 * M * K * D + 8 * M * D,
        transcendentals=M,
        bytes_accessed=(M * K + K * D + 2 * M * D) * 2 + 4 * D * 4)
    return pl.pallas_call(
        _proj_add_ln_kernel,
        out_shape=jax.ShapeDtypeStruct((M, D), resid.dtype),
        grid=(pl.cdiv(M, tm),),
        in_specs=[
            pl.BlockSpec((tm, K), lambda i: (i, 0)),
            pl.BlockSpec((tm, D), lambda i: (i, 0)),
            pl.BlockSpec((K, D), lambda i: (0, 0)),
            pl.BlockSpec((1, D), lambda i: (0, 0)),
            pl.BlockSpec((1, D), lambda i: (0, 0)),
            pl.BlockSpec((1, D), lambda i: (0, 0)),
        ],
        out_specs=pl.BlockSpec((tm, D), lambda i: (i, 0)),
        compiler_params=pltpu.CompilerParams(
            dimension_semantics=("parallel",),
            vmem_limit_bytes=_VMEM_LIMIT),
        cost_estimate=cost,
    )(x, resid, w, b.reshape(1, D), gamma.reshape(1, D), beta.reshape(1, D))


def _flash_body(q_ref, k_ref, v_ref, bias_ref, o_ref, m_sc, l_sc, acc_sc, *,
                scale):
    # q_ref: (1, H, tq, Dh), k_ref/v_ref: (1, H, tk, Dh); online softmax over
    # the kv grid axis; all heads in one batched dot_general.
    ki = pl.program_id(2)

    @pl.when(ki == 0)
    def _():
        m_sc[...] = jnp.full(m_sc.shape, -jnp.inf, dtype=jnp.float32)
        l_sc[...] = jnp.zeros(l_sc.shape, dtype=jnp.float32)
        acc_sc[...] = jnp.zeros(acc_sc.shape, dtype=jnp.float32)

    q = q_ref[0]                       # (H, tq, Dh) bf16
    k = k_ref[0]                       # (H, tk, Dh) bf16
    v = v_ref[0]                       # (H, tk, Dh) bf16

    s = jnp.einsum('hqd,hkd->hqk', q, k,
                   preferred_element_type=jnp.float32) * scale
    if bias_ref is not None:
        s = s + bias_ref[0]            # (1, tk) additive key-padding bias

    m_prev = m_sc[...]
    m_new = jnp.maximum(m_prev, jnp.max(s, axis=-1, keepdims=True))
    alpha = jnp.exp(m_prev - m_new)
    p = jnp.exp(s - m_new)
    l_sc[...] = alpha * l_sc[...] + jnp.sum(p, axis=-1, keepdims=True)
    acc_sc[...] = alpha * acc_sc[...] + jnp.einsum(
        'hqk,hkd->hqd', p.astype(v.dtype), v,
        preferred_element_type=jnp.float32)
    m_sc[...] = m_new

    @pl.when(ki == pl.num_programs(2) - 1)
    def _():
        inv_l = pl.reciprocal(l_sc[...], approx=True)   # EUP, off the VPU path
        out_h = acc_sc[...] * inv_l                     # (H, tq, Dh) f32
        n_head = out_h.shape[0]
        # Merge heads in-register (lane concat) -> one lane-dense (tq, D) store.
        out = jnp.concatenate([out_h[h] for h in range(n_head)], axis=-1)
        o_ref[0] = out.astype(o_ref.dtype)


def _flash_kernel(q_ref, k_ref, v_ref, o_ref, m_sc, l_sc, acc_sc, *, scale):
    _flash_body(q_ref, k_ref, v_ref, None, o_ref, m_sc, l_sc, acc_sc,
                scale=scale)


def _flash_masked_kernel(q_ref, k_ref, v_ref, bias_ref, o_ref, m_sc, l_sc,
                         acc_sc, *, scale):
    _flash_body(q_ref, k_ref, v_ref, bias_ref, o_ref, m_sc, l_sc, acc_sc,
                scale=scale)


def attention(q, k, v, bias):
    # q/k/v: [B, H, T, Dh] bf16; bias: None or [B, 1, T] f32 additive key mask.
    B, H, T, Dh = q.shape
    D = H * Dh
    scale = 1.0 / math.sqrt(Dh)
    tq = _seq_tile(T, 256)
    tk = _seq_tile(T, 512)
    nq = T // tq
    nk = T // tk

    q_spec = pl.BlockSpec((1, H, tq, Dh), lambda b, qi, ki: (b, 0, qi, 0))
    kv_spec = pl.BlockSpec((1, H, tk, Dh), lambda b, qi, ki: (b, 0, ki, 0))
    out_spec = pl.BlockSpec((1, tq, D), lambda b, qi, ki: (b, qi, 0))
    scratch = [pltpu.VMEM((H, tq, 1), jnp.float32),    # running max
               pltpu.VMEM((H, tq, 1), jnp.float32),    # running denom
               pltpu.VMEM((H, tq, Dh), jnp.float32)]   # output accumulator

    if bias is None:
        kern = functools.partial(_flash_kernel, scale=scale)
        in_specs = [q_spec, kv_spec, kv_spec]
        args = (q, k, v)
    else:
        kern = functools.partial(_flash_masked_kernel, scale=scale)
        in_specs = [q_spec, kv_spec, kv_spec,
                    pl.BlockSpec((1, 1, tk), lambda b, qi, ki: (b, 0, ki))]
        args = (q, k, v, bias)

    cost = pl.CostEstimate(
        flops=4 * B * H * T * T * Dh,
        transcendentals=B * H * T * T,
        bytes_accessed=(3 * B * H * T * Dh + B * T * D) * 2
                       + (B * T * 4 if bias is not None else 0))

    return pl.pallas_call(
        kern,
        out_shape=jax.ShapeDtypeStruct((B, T, D), q.dtype),
        grid_spec=pltpu.PrefetchScalarGridSpec(
            num_scalar_prefetch=0,
            grid=(B, nq, nk),
            in_specs=in_specs,
            out_specs=out_spec,
            scratch_shapes=scratch),
        compiler_params=pltpu.CompilerParams(
            dimension_semantics=("parallel", "parallel", "arbitrary"),
            vmem_limit_bytes=_VMEM_LIMIT),
        cost_estimate=cost,
    )(*args)


# ------------------------------ JAX glue ----------------------------------

def sinusoidal_pe(max_len, D):
    # TODO(synk): RelativePositionalEncoding is not defined in the provided
    # source; standard sinusoidal positional encoding is used in its place.
    pos = jnp.arange(max_len, dtype=jnp.float32)[:, None]
    i = jnp.arange(0, D, 2, dtype=jnp.float32)
    div = jnp.exp(-math.log(10000.0) * i / D)
    pe = jnp.zeros((max_len, D), jnp.float32)
    pe = pe.at[:, 0::2].set(jnp.sin(pos * div))
    pe = pe.at[:, 1::2].set(jnp.cos(pos * div))
    return pe


def transformer_layer(h, p, attn_bias, n_head):
    B, T, D = h.shape
    Dh = D // n_head
    x = h.reshape(B * T, D)

    # --- self-attention block (post-norm) ---
    qkv = linear(x, p["in_w"], p["in_b"])                    # [B*T, 3D] bf16
    # XLA head split (HBM, one pass) -> kernel sees leading-batch (H,T,Dh).
    qkv = jnp.transpose(qkv.reshape(B, T, 3, n_head, Dh), (2, 0, 3, 1, 4))
    attn = attention(qkv[0], qkv[1], qkv[2], attn_bias)      # [B, T, D]
    # fused: norm1(x + out_proj(attn))
    x = proj_add_ln(attn.reshape(B * T, D), x,
                    p["out_w"], p["out_b"], p["ln1_g"], p["ln1_b"])

    # --- feed-forward block (post-norm) ---
    f = linear(x, p["ff1_w"], p["ff1_b"], activation="gelu")  # [B*T, d_inner]
    # fused: norm2(x + ff2(f))
    x = proj_add_ln(f, x, p["ff2_w"], p["ff2_b"], p["ln2_g"], p["ln2_b"])

    return x.reshape(B, T, D)


@functools.partial(jax.jit, static_argnames=("n_head",))
def encoder_forward(params, tokens, n_head, length_mask=None):
    B, T = tokens.shape
    emb = params["emb"][tokens]                    # prenet Embedding (gather)
    h = (emb.astype(jnp.float32)
         + params["pos_emb"][None, :T, :]).astype(_ACT_DTYPE)  # dropout = id

    if length_mask is None:
        bias = None                                # no-mask kernel variant
    else:
        # True in src_key_padding_mask => key masked out.  O(B*T) bias only.
        bias = jnp.where(length_mask, -1e30, 0.0).astype(jnp.float32)[:, None, :]

    for p in params["layers"]:
        h = transformer_layer(h, p, bias, n_head)
    return h.astype(jnp.float32)


def init_params(key, n_vocab, d_hidden, n_head, d_inner, n_layers, max_len=64):
    keys = jax.random.split(key, 1 + n_layers)
    params = {
        "emb": (jax.random.normal(keys[0], (n_vocab, d_hidden), jnp.float32)
                * 0.02).astype(_W_DTYPE),
        "pos_emb": sinusoidal_pe(max_len, d_hidden),     # f32, computed once
        "layers": [],
    }
    for li in range(n_layers):
        ks = jax.random.split(keys[1 + li], 4)
        params["layers"].append({
            "in_w": (jax.random.normal(ks[0], (d_hidden, 3 * d_hidden),
                                       jnp.float32) * 0.02).astype(_W_DTYPE),
            "in_b": jnp.zeros((3 * d_hidden,), jnp.float32),
            "out_w": (jax.random.normal(ks[1], (d_hidden, d_hidden),
                                        jnp.float32) * 0.02).astype(_W_DTYPE),
            "out_b": jnp.zeros((d_hidden,), jnp.float32),
            "ff1_w": (jax.random.normal(ks[2], (d_hidden, d_inner),
                                        jnp.float32) * 0.02).astype(_W_DTYPE),
            "ff1_b": jnp.zeros((d_inner,), jnp.float32),
            "ff2_w": (jax.random.normal(ks[3], (d_inner, d_hidden),
                                        jnp.float32) * 0.02).astype(_W_DTYPE),
            "ff2_b": jnp.zeros((d_hidden,), jnp.float32),
            "ln1_g": jnp.ones((d_hidden,), jnp.float32),
            "ln1_b": jnp.zeros((d_hidden,), jnp.float32),
            "ln2_g": jnp.ones((d_hidden,), jnp.float32),
            "ln2_b": jnp.zeros((d_hidden,), jnp.float32),
        })
    return params


if __name__ == "__main__":
    # small shapes: batch=2, seq=8, d_hidden=32, n_head=4, d_inner=64, 3 layers
    B, T = 2, 8
    n_vocab, d_hidden, n_head, d_inner, n_layers = 50, 32, 4, 64, 3

    key = jax.random.PRNGKey(0)
    pkey, tkey = jax.random.split(key)
    params = init_params(pkey, n_vocab, d_hidden, n_head, d_inner, n_layers,
                         max_len=64)
    tokens = jax.random.randint(tkey, (B, T), 0, n_vocab, dtype=jnp.int32)

    # no-mask path
    out = encoder_forward(params, tokens, n_head=n_head, length_mask=None)
    out = jax.block_until_ready(out)
    assert out.shape == (B, T, d_hidden), out.shape
    assert bool(jnp.isfinite(out).all())

    # key-padding-mask path (last two positions of each sequence padded)
    mask = jnp.zeros((B, T), jnp.bool_).at[:, T - 2:].set(True)
    out_m = encoder_forward(params, tokens, n_head=n_head, length_mask=mask)
    out_m = jax.block_until_ready(out_m)
    assert out_m.shape == (B, T, d_hidden), out_m.shape
    assert bool(jnp.isfinite(out_m).all())

    print("KERNEL_OK")
</pallas_src>

<mosaic_0001>
module attributes {stable_mosaic.version = 11 : i64} {
  func.func @_linear_kernel(%arg0: i32, %arg1: i32, %arg2: memref<16x32xbf16, #tpu.memory_space<vmem>>, %arg3: memref<32x96xbf16, #tpu.memory_space<vmem>>, %arg4: memref<1x96xf32, #tpu.memory_space<vmem>>, %arg5: memref<16x96xbf16, #tpu.memory_space<vmem>>) attributes {dimension_semantics = [#tpu.dimension_semantics<parallel>, #tpu.dimension_semantics<parallel>], iteration_bounds = array<i64: 1, 1>, scalar_prefetch = 0 : i64, scratch_operands = 0 : i64, tpu.core_type = #tpu.core_type<tc>, window_params = [{transform_indices = @transform_0, window_bounds = array<i64: 16, 32>}, {transform_indices = @transform_1, window_bounds = array<i64: 32, 96>}, {transform_indices = @transform_2, window_bounds = array<i64: 1, 96>}, {transform_indices = @transform_3, window_bounds = array<i64: 16, 96>}]} {
    %c0 = arith.constant 0 : index
    %c0_0 = arith.constant 0 : index
    %0 = vector.load %arg2[%c0, %c0_0] : memref<16x32xbf16, #tpu.memory_space<vmem>>, vector<16x32xbf16>
    %c0_1 = arith.constant 0 : index
    %c0_2 = arith.constant 0 : index
    %1 = vector.load %arg3[%c0_1, %c0_2] : memref<32x96xbf16, #tpu.memory_space<vmem>>, vector<32x96xbf16>
    %cst = arith.constant dense<0.000000e+00> : vector<16x96xf32>
    %2 = tpu.matmul %0, %1, %cst {dimension_numbers = #tpu.dot_dimension_numbers<[1], [0], [0], [1], [0, 0, 1, 1], [], []>} : vector<16x32xbf16>, vector<32x96xbf16>, vector<16x96xf32> -> vector<16x96xf32>
    %c0_3 = arith.constant 0 : index
    %c0_4 = arith.constant 0 : index
    %3 = vector.load %arg4[%c0_3, %c0_4] : memref<1x96xf32, #tpu.memory_space<vmem>>, vector<1x96xf32>
    %4 = vector.broadcast %3 : vector<1x96xf32> to vector<16x96xf32>
    %5 = arith.addf %2, %4 : vector<16x96xf32>
    %6 = arith.truncf %5 : vector<16x96xf32> to vector<16x96xbf16>
    %c0_5 = arith.constant 0 : index
    %c0_6 = arith.constant 0 : index
    %7 = vector.load %arg5[%c0_5, %c0_6] : memref<16x96xbf16, #tpu.memory_space<vmem>>, vector<16x96xbf16>
    tpu.vector_store %arg5[%c0_5, %c0_6], %6 {strides = array<i32>} : memref<16x96xbf16, #tpu.memory_space<vmem>>, vector<16x96xbf16>,
    return
  }
  func.func @transform_0(%arg0: i32, %arg1: i32) -> (i32, i32) {
    %c0_i32 = arith.constant 0 : i32
    %c0_i32_0 = arith.constant 0 : i32
    return %arg0, %c0_i32 : i32, i32
  }
  func.func @transform_1(%arg0: i32, %arg1: i32) -> (i32, i32) {
    %c0_i32 = arith.constant 0 : i32
    %c0_i32_0 = arith.constant 0 : i32
    return %c0_i32, %arg1 : i32, i32
  }
  func.func @transform_2(%arg0: i32, %arg1: i32) -> (i32, i32) {
    %c0_i32 = arith.constant 0 : i32
    %c0_i32_0 = arith.constant 0 : i32
    return %c0_i32, %arg1 : i32, i32
  }
  func.func @transform_3(%arg0: i32, %arg1: i32) -> (i32, i32) {
    %c0_i32 = arith.constant 0 : i32
    return %arg0, %arg1 : i32, i32
  }
}

module attributes {stable_mosaic.version = 11 : i64} {
  func.func @_proj_add_ln_kernel(%arg0: i32, %arg1: memref<16x32xbf16, #tpu.memory_space<vmem>>, %arg2: memref<16x32xbf16, #tpu.memory_space<vmem>>, %arg3: memref<32x32xbf16, #tpu.memory_space<vmem>>, %arg4: memref<1x32xf32, #tpu.memory_space<vmem>>, %arg5: memref<1x32xf32, #tpu.memory_space<vmem>>, %arg6: memref<1x32xf32, #tpu.memory_space<vmem>>, %arg7: memref<16x32xbf16, #tpu.memory_space<vmem>>) attributes {dimension_semantics = [#tpu.dimension_semantics<parallel>], iteration_bounds = array<i64: 1>, scalar_prefetch = 0 : i64, scratch_operands = 0 : i64, tpu.core_type = #tpu.core_type<tc>, window_params = [{transform_indices = @transform_0, window_bounds = array<i64: 16, 32>}, {transform_indices = @transform_1, window_bounds = array<i64: 16, 32>}, {pipeline_mode = #tpu.pipeline_mode<synchronous>, transform_indices = @transform_2, window_bounds = array<i64: 32, 32>}, {pipeline_mode = #tpu.pipeline_mode<synchronous>, transform_indices = @transform_3, window_bounds = array<i64: 1, 32>}, {pipeline_mode = #tpu.pipeline_mode<synchronous>, transform_indices = @transform_4, window_bounds = array<i64: 1, 32>}, {pipeline_mode = #tpu.pipeline_mode<synchronous>, transform_indices = @transform_5, window_bounds = array<i64: 1, 32>}, {transform_indices = @transform_6, window_bounds = array<i64: 16, 32>}]} {
    %c0 = arith.constant 0 : index
    %c0_0 = arith.constant 0 : index
    %0 = vector.load %arg1[%c0, %c0_0] : memref<16x32xbf16, #tpu.memory_space<vmem>>, vector<16x32xbf16>
    %c0_1 = arith.constant 0 : index
    %c0_2 = arith.constant 0 : index
    %1 = vector.load %arg3[%c0_1, %c0_2] : memref<32x32xbf16, #tpu.memory_space<vmem>>, vector<32x32xbf16>
    %cst = arith.constant dense<0.000000e+00> : vector<16x32xf32>
    %2 = tpu.matmul %0, %1, %cst {dimension_numbers = #tpu.dot_dimension_numbers<[1], [0], [0], [1], [0, 0, 1, 1], [], []>} : vector<16x32xbf16>, vector<32x32xbf16>, vector<16x32xf32> -> vector<16x32xf32>
    %c0_3 = arith.constant 0 : index
    %c0_4 = arith.constant 0 : index
    %3 = vector.load %arg4[%c0_3, %c0_4] : memref<1x32xf32, #tpu.memory_space<vmem>>, vector<1x32xf32>
    %4 = vector.broadcast %3 : vector<1x32xf32> to vector<16x32xf32>
    %5 = arith.addf %2, %4 : vector<16x32xf32>
    %c0_5 = arith.constant 0 : index
    %c0_6 = arith.constant 0 : index
    %6 = vector.load %arg2[%c0_5, %c0_6] : memref<16x32xbf16, #tpu.memory_space<vmem>>, vector<16x32xbf16>
    %7 = arith.extf %6 : vector<16x32xbf16> to vector<16x32xf32>
    %8 = arith.addf %5, %7 : vector<16x32xf32>
    %cst_7 = arith.constant dense<0.000000e+00> : vector<16xf32>
    %9 = vector.multi_reduction <add>, %8, %cst_7 [1] : vector<16x32xf32> to vector<16xf32>
    %10 = vector.shape_cast %9 : vector<16xf32> to vector<16x1xf32>
    %cst_8 = arith.constant 3.200000e+01 : f32
    %11 = vector.broadcast %cst_8 : f32 to vector<16x1xf32>
    %12 = arith.divf %10, %11 : vector<16x1xf32>
    %13 = vector.broadcast %12 : vector<16x1xf32> to vector<16x32xf32>
    %14 = arith.subf %8, %13 : vector<16x32xf32>
    %15 = arith.mulf %14, %14 : vector<16x32xf32>
    %cst_9 = arith.constant dense<0.000000e+00> : vector<16xf32>
    %16 = vector.multi_reduction <add>, %15, %cst_9 [1] : vector<16x32xf32> to vector<16xf32>
    %17 = vector.shape_cast %16 : vector<16xf32> to vector<16x1xf32>
    %cst_10 = arith.constant 3.200000e+01 : f32
    %18 = vector.broadcast %cst_10 : f32 to vector<16x1xf32>
    %19 = arith.divf %17, %18 : vector<16x1xf32>
    %20 = vector.broadcast %12 : vector<16x1xf32> to vector<16x32xf32>
    %21 = arith.subf %8, %20 : vector<16x32xf32>
    %cst_11 = arith.constant 9.99999974E-6 : f32
    %22 = vector.broadcast %cst_11 : f32 to vector<16x1xf32>
    %23 = arith.addf %19, %22 : vector<16x1xf32>
    %24 = math.rsqrt %23 : vector<16x1xf32>
    %25 = vector.broadcast %24 : vector<16x1xf32> to vector<16x32xf32>
    %26 = arith.mulf %21, %25 : vector<16x32xf32>
    %c0_12 = arith.constant 0 : index
    %c0_13 = arith.constant 0 : index
    %27 = vector.load %arg5[%c0_12, %c0_13] : memref<1x32xf32, #tpu.memory_space<vmem>>, vector<1x32xf32>
    %28 = vector.broadcast %27 : vector<1x32xf32> to vector<16x32xf32>
    %29 = arith.mulf %26, %28 : vector<16x32xf32>
    %c0_14 = arith.constant 0 : index
    %c0_15 = arith.constant 0 : index
    %30 = vector.load %arg6[%c0_14, %c0_15] : memref<1x32xf32, #tpu.memory_space<vmem>>, vector<1x32xf32>
    %31 = vector.broadcast %30 : vector<1x32xf32> to vector<16x32xf32>
    %32 = arith.addf %29, %31 : vector<16x32xf32>
    %33 = arith.truncf %32 : vector<16x32xf32> to vector<16x32xbf16>
    %c0_16 = arith.constant 0 : index
    %c0_17 = arith.constant 0 : index
    %34 = vector.load %arg7[%c0_16, %c0_17] : memref<16x32xbf16, #tpu.memory_space<vmem>>, vector<16x32xbf16>
    tpu.vector_store %arg7[%c0_16, %c0_17], %33 {strides = array<i32>} : memref<16x32xbf16, #tpu.memory_space<vmem>>, vector<16x32xbf16>,
    return
  }
  func.func @transform_0(%arg0: i32) -> (i32, i32) {
    %c0_i32 = arith.constant 0 : i32
    %c0_i32_0 = arith.constant 0 : i32
    return %arg0, %c0_i32 : i32, i32
  }
  func.func @transform_1(%arg0: i32) -> (i32, i32) {
    %c0_i32 = arith.constant 0 : i32
    %c0_i32_0 = arith.constant 0 : i32
    return %arg0, %c0_i32 : i32, i32
  }
  func.func @transform_2(%arg0: i32) -> (i32, i32) {
    %c0_i32 = arith.constant 0 : i32
    %c0_i32_0 = arith.constant 0 : i32
    %c0_i32_1 = arith.constant 0 : i32
    return %c0_i32, %c0_i32_0 : i32, i32
  }
  func.func @transform_3(%arg0: i32) -> (i32, i32) {
    %c0_i32 = arith.constant 0 : i32
    %c0_i32_0 = arith.constant 0 : i32
    %c0_i32_1 = arith.constant 0 : i32
    return %c0_i32, %c0_i32_0 : i32, i32
  }
  func.func @transform_4(%arg0: i32) -> (i32, i32) {
    %c0_i32 = arith.constant 0 : i32
    %c0_i32_0 = arith.constant 0 : i32
    %c0_i32_1 = arith.constant 0 : i32
    return %c0_i32, %c0_i32_0 : i32, i32
  }
  func.func @transform_5(%arg0: i32) -> (i32, i32) {
    %c0_i32 = arith.constant 0 : i32
    %c0_i32_0 = arith.constant 0 : i32
    %c0_i32_1 = arith.constant 0 : i32
    return %c0_i32, %c0_i32_0 : i32, i32
  }
  func.func @transform_6(%arg0: i32) -> (i32, i32) {
    %c0_i32 = arith.constant 0 : i32
    %c0_i32_0 = arith.constant 0 : i32
    return %arg0, %c0_i32 : i32, i32
  }
}

module attributes {stable_mosaic.version = 11 : i64} {
  func.func @_linear_kernel(%arg0: i32, %arg1: i32, %arg2: memref<16x32xbf16, #tpu.memory_space<vmem>>, %arg3: memref<32x64xbf16, #tpu.memory_space<vmem>>, %arg4: memref<1x64xf32, #tpu.memory_space<vmem>>, %arg5: memref<16x64xbf16, #tpu.memory_space<vmem>>) attributes {dimension_semantics = [#tpu.dimension_semantics<parallel>, #tpu.dimension_semantics<parallel>], iteration_bounds = array<i64: 1, 1>, scalar_prefetch = 0 : i64, scratch_operands = 0 : i64, tpu.core_type = #tpu.core_type<tc>, window_params = [{transform_indices = @transform_0, window_bounds = array<i64: 16, 32>}, {transform_indices = @transform_1, window_bounds = array<i64: 32, 64>}, {transform_indices = @transform_2, window_bounds = array<i64: 1, 64>}, {transform_indices = @transform_3, window_bounds = array<i64: 16, 64>}]} {
    %c0 = arith.constant 0 : index
    %c0_0 = arith.constant 0 : index
    %0 = vector.load %arg2[%c0, %c0_0] : memref<16x32xbf16, #tpu.memory_space<vmem>>, vector<16x32xbf16>
    %c0_1 = arith.constant 0 : index
    %c0_2 = arith.constant 0 : index
    %1 = vector.load %arg3[%c0_1, %c0_2] : memref<32x64xbf16, #tpu.memory_space<vmem>>, vector<32x64xbf16>
    %cst = arith.constant dense<0.000000e+00> : vector<16x64xf32>
    %2 = tpu.matmul %0, %1, %cst {dimension_numbers = #tpu.dot_dimension_numbers<[1], [0], [0], [1], [0, 0, 1, 1], [], []>} : vector<16x32xbf16>, vector<32x64xbf16>, vector<16x64xf32> -> vector<16x64xf32>
    %c0_3 = arith.constant 0 : index
    %c0_4 = arith.constant 0 : index
    %3 = vector.load %arg4[%c0_3, %c0_4] : memref<1x64xf32, #tpu.memory_space<vmem>>, vector<1x64xf32>
    %4 = vector.broadcast %3 : vector<1x64xf32> to vector<16x64xf32>
    %5 = arith.addf %2, %4 : vector<16x64xf32>
    %6 = arith.mulf %5, %5 : vector<16x64xf32>
    %7 = arith.mulf %5, %6 : vector<16x64xf32>
    %cst_5 = arith.constant 4.471500e-02 : f32
    %8 = vector.broadcast %cst_5 : f32 to vector<16x64xf32>
    %9 = arith.mulf %8, %7 : vector<16x64xf32>
    %10 = arith.addf %5, %9 : vector<16x64xf32>
    %cst_6 = arith.constant 0.797884583 : f32
    %11 = vector.broadcast %cst_6 : f32 to vector<16x64xf32>
    %12 = arith.mulf %11, %10 : vector<16x64xf32>
    %13 = math.tanh %12 : vector<16x64xf32>
    %cst_7 = arith.constant 1.000000e+00 : f32
    %14 = vector.broadcast %cst_7 : f32 to vector<16x64xf32>
    %15 = arith.addf %14, %13 : vector<16x64xf32>
    %cst_8 = arith.constant 5.000000e-01 : f32
    %16 = vector.broadcast %cst_8 : f32 to vector<16x64xf32>
    %17 = arith.mulf %16, %15 : vector<16x64xf32>
    %18 = arith.mulf %5, %17 : vector<16x64xf32>
    %19 = arith.truncf %18 : vector<16x64xf32> to vector<16x64xbf16>
    %c0_9 = arith.constant 0 : index
    %c0_10 = arith.constant 0 : index
    %20 = vector.load %arg5[%c0_9, %c0_10] : memref<16x64xbf16, #tpu.memory_space<vmem>>, vector<16x64xbf16>
    tpu.vector_store %arg5[%c0_9, %c0_10], %19 {strides = array<i32>} : memref<16x64xbf16, #tpu.memory_space<vmem>>, vector<16x64xbf16>,
    return
  }
  func.func @transform_0(%arg0: i32, %arg1: i32) -> (i32, i32) {
    %c0_i32 = arith.constant 0 : i32
    %c0_i32_0 = arith.constant 0 : i32
    return %arg0, %c0_i32 : i32, i32
  }
  func.func @transform_1(%arg0: i32, %arg1: i32) -> (i32, i32) {
    %c0_i32 = arith.constant 0 : i32
    %c0_i32_0 = arith.constant 0 : i32
    return %c0_i32, %arg1 : i32, i32
  }
  func.func @transform_2(%arg0: i32, %arg1: i32) -> (i32, i32) {
    %c0_i32 = arith.constant 0 : i32
    %c0_i32_0 = arith.constant 0 : i32
    return %c0_i32, %arg1 : i32, i32
  }
  func.func @transform_3(%arg0: i32, %arg1: i32) -> (i32, i32) {
    %c0_i32 = arith.constant 0 : i32
    return %arg0, %arg1 : i32, i32
  }
}

module attributes {stable_mosaic.version = 11 : i64} {
  func.func @_flash_kernel(%arg0: i32, %arg1: i32, %arg2: i32, %arg3: memref<1x4x8x8xbf16, #tpu.memory_space<vmem>>, %arg4: memref<1x4x8x8xbf16, #tpu.memory_space<vmem>>, %arg5: memref<1x4x8x8xbf16, #tpu.memory_space<vmem>>, %arg6: memref<1x8x32xbf16, #tpu.memory_space<vmem>>, %arg7: memref<4x8x1xf32, #tpu.memory_space<vmem>>, %arg8: memref<4x8x1xf32, #tpu.memory_space<vmem>>, %arg9: memref<4x8x8xf32, #tpu.memory_space<vmem>>) attributes {dimension_semantics = [#tpu.dimension_semantics<parallel>, #tpu.dimension_semantics<parallel>, #tpu.dimension_semantics<arbitrary>], iteration_bounds = array<i64: 2, 1, 1>, scalar_prefetch = 0 : i64, scratch_operands = 3 : i64, tpu.core_type = #tpu.core_type<tc>, window_params = [{transform_indices = @transform_0, window_bounds = array<i64: 1, 4, 8, 8>}, {transform_indices = @transform_1, window_bounds = array<i64: 1, 4, 8, 8>}, {transform_indices = @transform_2, window_bounds = array<i64: 1, 4, 8, 8>}, {transform_indices = @transform_3, window_bounds = array<i64: 1, 8, 32>}]} {
    %c0_i32 = arith.constant 0 : i32
    %0 = arith.cmpi eq, %arg2, %c0_i32 : i32
    %1 = arith.extui %0 : i1 to i32
    %c0_i32_0 = arith.constant 0 : i32
    %2 = arith.cmpi ne, %1, %c0_i32_0 : i32
    scf.if %2 {
      %cst_36 = arith.constant 0xFF800000 : f32
      %38 = vector.broadcast %cst_36 : f32 to vector<4x8x1xf32>
      %c0_37 = arith.constant 0 : index
      %c0_38 = arith.constant 0 : index
      %c0_39 = arith.constant 0 : index
      %39 = vector.load %arg7[%c0_37, %c0_38, %c0_39] : memref<4x8x1xf32, #tpu.memory_space<vmem>>, vector<4x8x1xf32>
      tpu.vector_store %arg7[%c0_37, %c0_38, %c0_39], %38 {strides = array<i32>} : memref<4x8x1xf32, #tpu.memory_space<vmem>>, vector<4x8x1xf32>,
      %cst_40 = arith.constant 0.000000e+00 : f32
      %40 = vector.broadcast %cst_40 : f32 to vector<4x8x1xf32>
      %c0_41 = arith.constant 0 : index
      %c0_42 = arith.constant 0 : index
      %c0_43 = arith.constant 0 : index
      %41 = vector.load %arg8[%c0_41, %c0_42, %c0_43] : memref<4x8x1xf32, #tpu.memory_space<vmem>>, vector<4x8x1xf32>
      tpu.vector_store %arg8[%c0_41, %c0_42, %c0_43], %40 {strides = array<i32>} : memref<4x8x1xf32, #tpu.memory_space<vmem>>, vector<4x8x1xf32>,
      %cst_44 = arith.constant 0.000000e+00 : f32
      %42 = vector.broadcast %cst_44 : f32 to vector<4x8x8xf32>
      %c0_45 = arith.constant 0 : index
      %c0_46 = arith.constant 0 : index
      %c0_47 = arith.constant 0 : index
      %43 = vector.load %arg9[%c0_45, %c0_46, %c0_47] : memref<4x8x8xf32, #tpu.memory_space<vmem>>, vector<4x8x8xf32>
      tpu.vector_store %arg9[%c0_45, %c0_46, %c0_47], %42 {strides = array<i32>} : memref<4x8x8xf32, #tpu.memory_space<vmem>>, vector<4x8x8xf32>,
    } else {
    }
    %c0 = arith.constant 0 : index
    %c0_1 = arith.constant 0 : index
    %c0_2 = arith.constant 0 : index
    %c0_3 = arith.constant 0 : index
    %3 = vector.load %arg3[%c0, %c0_1, %c0_2, %c0_3] : memref<1x4x8x8xbf16, #tpu.memory_space<vmem>>, vector<1x4x8x8xbf16>
    %4 = vector.shape_cast %3 : vector<1x4x8x8xbf16> to vector<4x8x8xbf16>
    %c0_4 = arith.constant 0 : index
    %c0_5 = arith.constant 0 : index
    %c0_6 = arith.constant 0 : index
    %c0_7 = arith.constant 0 : index
    %5 = vector.load %arg4[%c0_4, %c0_5, %c0_6, %c0_7] : memref<1x4x8x8xbf16, #tpu.memory_space<vmem>>, vector<1x4x8x8xbf16>
    %6 = vector.shape_cast %5 : vector<1x4x8x8xbf16> to vector<4x8x8xbf16>
    %c0_8 = arith.constant 0 : index
    %c0_9 = arith.constant 0 : index
    %c0_10 = arith.constant 0 : index
    %c0_11 = arith.constant 0 : index
    %7 = vector.load %arg5[%c0_8, %c0_9, %c0_10, %c0_11] : memref<1x4x8x8xbf16, #tpu.memory_space<vmem>>, vector<1x4x8x8xbf16>
    %8 = vector.shape_cast %7 : vector<1x4x8x8xbf16> to vector<4x8x8xbf16>
    "tpu.trace_start"() <{level = 10 : i32, message = "hqd,hkd->hqk"}> : () -> ()
    %cst = arith.constant dense<0.000000e+00> : vector<4x8x8xf32>
    %9 = tpu.matmul %4, %6, %cst {dimension_numbers = #tpu.dot_dimension_numbers<[2], [2], [1], [1], [0, 0, 0, 1, 1, 1], [0], [0]>} : vector<4x8x8xbf16>, vector<4x8x8xbf16>, vector<4x8x8xf32> -> vector<4x8x8xf32>
    "tpu.trace_stop"() : () -> ()
    %cst_12 = arith.constant 0.353553385 : f32
    %10 = vector.broadcast %cst_12 : f32 to vector<4x8x8xf32>
    %11 = arith.mulf %9, %10 : vector<4x8x8xf32>
    %c0_13 = arith.constant 0 : index
    %c0_14 = arith.constant 0 : index
    %c0_15 = arith.constant 0 : index
    %12 = vector.load %arg7[%c0_13, %c0_14, %c0_15] : memref<4x8x1xf32, #tpu.memory_space<vmem>>, vector<4x8x1xf32>
    %cst_16 = arith.constant dense<0xFF800000> : vector<4x8xf32>
    %13 = vector.multi_reduction <maximumf>, %11, %cst_16 [2] : vector<4x8x8xf32> to vector<4x8xf32>
    %14 = vector.shape_cast %13 : vector<4x8xf32> to vector<4x8x1xf32>
    %15 = arith.maximumf %12, %14 : vector<4x8x1xf32>
    %16 = arith.subf %12, %15 : vector<4x8x1xf32>
    %17 = math.exp %16 : vector<4x8x1xf32>
    %18 = vector.broadcast %15 : vector<4x8x1xf32> to vector<4x8x8xf32>
    %19 = arith.subf %11, %18 : vector<4x8x8xf32>
    %20 = math.exp %19 : vector<4x8x8xf32>
    %c0_17 = arith.constant 0 : index
    %c0_18 = arith.constant 0 : index
    %c0_19 = arith.constant 0 : index
    %21 = vector.load %arg8[%c0_17, %c0_18, %c0_19] : memref<4x8x1xf32, #tpu.memory_space<vmem>>, vector<4x8x1xf32>
    %22 = arith.mulf %17, %21 : vector<4x8x1xf32>
    %cst_20 = arith.constant dense<0.000000e+00> : vector<4x8xf32>
    %23 = vector.multi_reduction <add>, %20, %cst_20 [2] : vector<4x8x8xf32> to vector<4x8xf32>
    %24 = vector.shape_cast %23 : vector<4x8xf32> to vector<4x8x1xf32>
    %25 = arith.addf %22, %24 : vector<4x8x1xf32>
    %c0_21 = arith.constant 0 : index
    %c0_22 = arith.constant 0 : index
    %c0_23 = arith.constant 0 : index
    %26 = vector.load %arg8[%c0_21, %c0_22, %c0_23] : memref<4x8x1xf32, #tpu.memory_space<vmem>>, vector<4x8x1xf32>
    tpu.vector_store %arg8[%c0_21, %c0_22, %c0_23], %25 {strides = array<i32>} : memref<4x8x1xf32, #tpu.memory_space<vmem>>, vector<4x8x1xf32>,
    %c0_24 = arith.constant 0 : index
    %c0_25 = arith.constant 0 : index
    %c0_26 = arith.constant 0 : index
    %27 = vector.load %arg9[%c0_24, %c0_25, %c0_26] : memref<4x8x8xf32, #tpu.memory_space<vmem>>, vector<4x8x8xf32>
    %28 = vector.broadcast %17 : vector<4x8x1xf32> to vector<4x8x8xf32>
    %29 = arith.mulf %28, %27 : vector<4x8x8xf32>
    %30 = arith.truncf %20 : vector<4x8x8xf32> to vector<4x8x8xbf16>
    "tpu.trace_start"() <{level = 10 : i32, message = "hqk,hkd->hqd"}> : () -> ()
    %cst_27 = arith.constant dense<0.000000e+00> : vector<4x8x8xf32>
    %31 = tpu.matmul %30, %8, %cst_27 {dimension_numbers = #tpu.dot_dimension_numbers<[2], [1], [1], [2], [0, 0, 0, 1, 1, 2], [0], [0]>} : vector<4x8x8xbf16>, vector<4x8x8xbf16>, vector<4x8x8xf32> -> vector<4x8x8xf32>
    "tpu.trace_stop"() : () -> ()
    %32 = arith.addf %29, %31 : vector<4x8x8xf32>
    %c0_28 = arith.constant 0 : index
    %c0_29 = arith.constant 0 : index
    %c0_30 = arith.constant 0 : index
    %33 = vector.load %arg9[%c0_28, %c0_29, %c0_30] : memref<4x8x8xf32, #tpu.memory_space<vmem>>, vector<4x8x8xf32>
    tpu.vector_store %arg9[%c0_28, %c0_29, %c0_30], %32 {strides = array<i32>} : memref<4x8x8xf32, #tpu.memory_space<vmem>>, vector<4x8x8xf32>,
    %c0_31 = arith.constant 0 : index
    %c0_32 = arith.constant 0 : index
    %c0_33 = arith.constant 0 : index
    %34 = vector.load %arg7[%c0_31, %c0_32, %c0_33] : memref<4x8x1xf32, #tpu.memory_space<vmem>>, vector<4x8x1xf32>
    tpu.vector_store %arg7[%c0_31, %c0_32, %c0_33], %15 {strides = array<i32>} : memref<4x8x1xf32, #tpu.memory_space<vmem>>, vector<4x8x1xf32>,
    %c0_i32_34 = arith.constant 0 : i32
    %35 = arith.cmpi eq, %arg2, %c0_i32_34 : i32
    %36 = arith.extui %35 : i1 to i32
    %c0_i32_35 = arith.constant 0 : i32
    %37 = arith.cmpi ne, %36, %c0_i32_35 : i32
    scf.if %37 {
      %c0_36 = arith.constant 0 : index
      %c0_37 = arith.constant 0 : index
      %c0_38 = arith.constant 0 : index
      %38 = vector.load %arg8[%c0_36, %c0_37, %c0_38] : memref<4x8x1xf32, #tpu.memory_space<vmem>>, vector<4x8x1xf32>
      %39 = tpu.reciprocal %38 {approx = true} : vector<4x8x1xf32> -> vector<4x8x1xf32>
      %c0_39 = arith.constant 0 : index
      %c0_40 = arith.constant 0 : index
      %c0_41 = arith.constant 0 : index
      %40 = vector.load %arg9[%c0_39, %c0_40, %c0_41] : memref<4x8x8xf32, #tpu.memory_space<vmem>>, vector<4x8x8xf32>
      %41 = vector.broadcast %39 : vector<4x8x1xf32> to vector<4x8x8xf32>
      %42 = arith.mulf %40, %41 : vector<4x8x8xf32>
      %43 = vector.extract_strided_slice %42 {offsets = [0, 0, 0], sizes = [1, 8, 8], strides = [1, 1, 1]} : vector<4x8x8xf32> to vector<1x8x8xf32>
      %44 = vector.shape_cast %43 : vector<1x8x8xf32> to vector<8x8xf32>
      %45 = vector.extract_strided_slice %42 {offsets = [1, 0, 0], sizes = [1, 8, 8], strides = [1, 1, 1]} : vector<4x8x8xf32> to vector<1x8x8xf32>
      %46 = vector.shape_cast %45 : vector<1x8x8xf32> to vector<8x8xf32>
      %47 = vector.extract_strided_slice %42 {offsets = [2, 0, 0], sizes = [1, 8, 8], strides = [1, 1, 1]} : vector<4x8x8xf32> to vector<1x8x8xf32>
      %48 = vector.shape_cast %47 : vector<1x8x8xf32> to vector<8x8xf32>
      %49 = vector.extract_strided_slice %42 {offsets = [3, 0, 0], sizes = [1, 8, 8], strides = [1, 1, 1]} : vector<4x8x8xf32> to vector<1x8x8xf32>
      %50 = vector.shape_cast %49 : vector<1x8x8xf32> to vector<8x8xf32>
      %51 = tpu.concatenate %44, %46, %48, %50 in 1 : vector<8x8xf32>, vector<8x8xf32>, vector<8x8xf32>, vector<8x8xf32> -> vector<8x32xf32>
      %52 = arith.truncf %51 : vector<8x32xf32> to vector<8x32xbf16>
      %c0_42 = arith.constant 0 : index
      %c0_43 = arith.constant 0 : index
      %c0_44 = arith.constant 0 : index
      %53 = vector.load %arg6[%c0_42, %c0_43, %c0_44] : memref<1x8x32xbf16, #tpu.memory_space<vmem>>, vector<1x8x32xbf16>
      %54 = vector.shape_cast %53 : vector<1x8x32xbf16> to vector<8x32xbf16>
      %55 = vector.shape_cast %52 : vector<8x32xbf16> to vector<1x8x32xbf16>
      tpu.vector_store %arg6[%c0_42, %c0_43, %c0_44], %55 {strides = array<i32>} : memref<1x8x32xbf16, #tpu.memory_space<vmem>>, vector<1x8x32xbf16>,
    } else {
    }
    return
  }
  func.func @transform_0(%arg0: i32, %arg1: i32, %arg2: i32) -> (i32, i32, i32, i32) {
    %c0_i32 = arith.constant 0 : i32
    %c0_i32_0 = arith.constant 0 : i32
    %c0_i32_1 = arith.constant 0 : i32
    return %arg0, %c0_i32, %arg1, %c0_i32_0 : i32, i32, i32, i32
  }
  func.func @transform_1(%arg0: i32, %arg1: i32, %arg2: i32) -> (i32, i32, i32, i32) {
    %c0_i32 = arith.constant 0 : i32
    %c0_i32_0 = arith.constant 0 : i32
    %c0_i32_1 = arith.constant 0 : i32
    return %arg0, %c0_i32, %arg2, %c0_i32_0 : i32, i32, i32, i32
  }
  func.func @transform_2(%arg0: i32, %arg1: i32, %arg2: i32) -> (i32, i32, i32, i32) {
    %c0_i32 = arith.constant 0 : i32
    %c0_i32_0 = arith.constant 0 : i32
    %c0_i32_1 = arith.constant 0 : i32
    return %arg0, %c0_i32, %arg2, %c0_i32_0 : i32, i32, i32, i32
  }
  func.func @transform_3(%arg0: i32, %arg1: i32, %arg2: i32) -> (i32, i32, i32) {
    %c0_i32 = arith.constant 0 : i32
    %c0_i32_0 = arith.constant 0 : i32
    return %arg0, %arg1, %c0_i32 : i32, i32, i32
  }
}

module attributes {stable_mosaic.version = 11 : i64} {
  func.func @_proj_add_ln_kernel(%arg0: i32, %arg1: memref<16x64xbf16, #tpu.memory_space<vmem>>, %arg2: memref<16x32xbf16, #tpu.memory_space<vmem>>, %arg3: memref<64x32xbf16, #tpu.memory_space<vmem>>, %arg4: memref<1x32xf32, #tpu.memory_space<vmem>>, %arg5: memref<1x32xf32, #tpu.memory_space<vmem>>, %arg6: memref<1x32xf32, #tpu.memory_space<vmem>>, %arg7: memref<16x32xbf16, #tpu.memory_space<vmem>>) attributes {dimension_semantics = [#tpu.dimension_semantics<parallel>], iteration_bounds = array<i64: 1>, scalar_prefetch = 0 : i64, scratch_operands = 0 : i64, tpu.core_type = #tpu.core_type<tc>, window_params = [{transform_indices = @transform_0, window_bounds = array<i64: 16, 64>}, {transform_indices = @transform_1, window_bounds = array<i64: 16, 32>}, {pipeline_mode = #tpu.pipeline_mode<synchronous>, transform_indices = @transform_2, window_bounds = array<i64: 64, 32>}, {pipeline_mode = #tpu.pipeline_mode<synchronous>, transform_indices = @transform_3, window_bounds = array<i64: 1, 32>}, {pipeline_mode = #tpu.pipeline_mode<synchronous>, transform_indices = @transform_4, window_bounds = array<i64: 1, 32>}, {pipeline_mode = #tpu.pipeline_mode<synchronous>, transform_indices = @transform_5, window_bounds = array<i64: 1, 32>}, {transform_indices = @transform_6, window_bounds = array<i64: 16, 32>}]} {
    %c0 = arith.constant 0 : index
    %c0_0 = arith.constant 0 : index
    %0 = vector.load %arg1[%c0, %c0_0] : memref<16x64xbf16, #tpu.memory_space<vmem>>, vector<16x64xbf16>
    %c0_1 = arith.constant 0 : index
    %c0_2 = arith.constant 0 : index
    %1 = vector.load %arg3[%c0_1, %c0_2] : memref<64x32xbf16, #tpu.memory_space<vmem>>, vector<64x32xbf16>
    %cst = arith.constant dense<0.000000e+00> : vector<16x32xf32>
    %2 = tpu.matmul %0, %1, %cst {dimension_numbers = #tpu.dot_dimension_numbers<[1], [0], [0], [1], [0, 0, 1, 1], [], []>} : vector<16x64xbf16>, vector<64x32xbf16>, vector<16x32xf32> -> vector<16x32xf32>
    %c0_3 = arith.constant 0 : index
    %c0_4 = arith.constant 0 : index
    %3 = vector.load %arg4[%c0_3, %c0_4] : memref<1x32xf32, #tpu.memory_space<vmem>>, vector<1x32xf32>
    %4 = vector.broadcast %3 : vector<1x32xf32> to vector<16x32xf32>
    %5 = arith.addf %2, %4 : vector<16x32xf32>
    %c0_5 = arith.constant 0 : index
    %c0_6 = arith.constant 0 : index
    %6 = vector.load %arg2[%c0_5, %c0_6] : memref<16x32xbf16, #tpu.memory_space<vmem>>, vector<16x32xbf16>
    %7 = arith.extf %6 : vector<16x32xbf16> to vector<16x32xf32>
    %8 = arith.addf %5, %7 : vector<16x32xf32>
    %cst_7 = arith.constant dense<0.000000e+00> : vector<16xf32>
    %9 = vector.multi_reduction <add>, %8, %cst_7 [1] : vector<16x32xf32> to vector<16xf32>
    %10 = vector.shape_cast %9 : vector<16xf32> to vector<16x1xf32>
    %cst_8 = arith.constant 3.200000e+01 : f32
    %11 = vector.broadcast %cst_8 : f32 to vector<16x1xf32>
    %12 = arith.divf %10, %11 : vector<16x1xf32>
    %13 = vector.broadcast %12 : vector<16x1xf32> to vector<16x32xf32>
    %14 = arith.subf %8, %13 : vector<16x32xf32>
    %15 = arith.mulf %14, %14 : vector<16x32xf32>
    %cst_9 = arith.constant dense<0.000000e+00> : vector<16xf32>
    %16 = vector.multi_reduction <add>, %15, %cst_9 [1] : vector<16x32xf32> to vector<16xf32>
    %17 = vector.shape_cast %16 : vector<16xf32> to vector<16x1xf32>
    %cst_10 = arith.constant 3.200000e+01 : f32
    %18 = vector.broadcast %cst_10 : f32 to vector<16x1xf32>
    %19 = arith.divf %17, %18 : vector<16x1xf32>
    %20 = vector.broadcast %12 : vector<16x1xf32> to vector<16x32xf32>
    %21 = arith.subf %8, %20 : vector<16x32xf32>
    %cst_11 = arith.constant 9.99999974E-6 : f32
    %22 = vector.broadcast %cst_11 : f32 to vector<16x1xf32>
    %23 = arith.addf %19, %22 : vector<16x1xf32>
    %24 = math.rsqrt %23 : vector<16x1xf32>
    %25 = vector.broadcast %24 : vector<16x1xf32> to vector<16x32xf32>
    %26 = arith.mulf %21, %25 : vector<16x32xf32>
    %c0_12 = arith.constant 0 : index
    %c0_13 = arith.constant 0 : index
    %27 = vector.load %arg5[%c0_12, %c0_13] : memref<1x32xf32, #tpu.memory_space<vmem>>, vector<1x32xf32>
    %28 = vector.broadcast %27 : vector<1x32xf32> to vector<16x32xf32>
    %29 = arith.mulf %26, %28 : vector<16x32xf32>
    %c0_14 = arith.constant 0 : index
    %c0_15 = arith.constant 0 : index
    %30 = vector.load %arg6[%c0_14, %c0_15] : memref<1x32xf32, #tpu.memory_space<vmem>>, vector<1x32xf32>
    %31 = vector.broadcast %30 : vector<1x32xf32> to vector<16x32xf32>
    %32 = arith.addf %29, %31 : vector<16x32xf32>
    %33 = arith.truncf %32 : vector<16x32xf32> to vector<16x32xbf16>
    %c0_16 = arith.constant 0 : index
    %c0_17 = arith.constant 0 : index
    %34 = vector.load %arg7[%c0_16, %c0_17] : memref<16x32xbf16, #tpu.memory_space<vmem>>, vector<16x32xbf16>
    tpu.vector_store %arg7[%c0_16, %c0_17], %33 {strides = array<i32>} : memref<16x32xbf16, #tpu.memory_space<vmem>>, vector<16x32xbf16>,
    return
  }
  func.func @transform_0(%arg0: i32) -> (i32, i32) {
    %c0_i32 = arith.constant 0 : i32
    %c0_i32_0 = arith.constant 0 : i32
    return %arg0, %c0_i32 : i32, i32
  }
  func.func @transform_1(%arg0: i32) -> (i32, i32) {
    %c0_i32 = arith.constant 0 : i32
    %c0_i32_0 = arith.constant 0 : i32
    return %arg0, %c0_i32 : i32, i32
  }
  func.func @transform_2(%arg0: i32) -> (i32, i32) {
    %c0_i32 = arith.constant 0 : i32
    %c0_i32_0 = arith.constant 0 : i32
    %c0_i32_1 = arith.constant 0 : i32
    return %c0_i32, %c0_i32_0 : i32, i32
  }
  func.func @transform_3(%arg0: i32) -> (i32, i32) {
    %c0_i32 = arith.constant 0 : i32
    %c0_i32_0 = arith.constant 0 : i32
    %c0_i32_1 = arith.constant 0 : i32
    return %c0_i32, %c0_i32_0 : i32, i32
  }
  func.func @transform_4(%arg0: i32) -> (i32, i32) {
    %c0_i32 = arith.constant 0 : i32
    %c0_i32_0 = arith.constant 0 : i32
    %c0_i32_1 = arith.constant 0 : i32
    return %c0_i32, %c0_i32_0 : i32, i32
  }
  func.func @transform_5(%arg0: i32) -> (i32, i32) {
    %c0_i32 = arith.constant 0 : i32
    %c0_i32_0 = arith.constant 0 : i32
    %c0_i32_1 = arith.constant 0 : i32
    return %c0_i32, %c0_i32_0 : i32, i32
  }
  func.func @transform_6(%arg0: i32) -> (i32, i32) {
    %c0_i32 = arith.constant 0 : i32
    %c0_i32_0 = arith.constant 0 : i32
    return %arg0, %c0_i32 : i32, i32
  }
}

</mosaic_0001>

<llo_original>
// kernel: encoder_forward.15
$region0: #{encoder_forward.15}
  #allocation0 [shape = 'u32[]', space=smem, size = 0x4, offset = 0x4, fixed_abs, tag = 'smem constant byte address 0x4 - core index']
  #allocation1 [shape = 'u32[72,128]{1,0:T(1,128)}', space=vmem, size = 0x9000, scoped, tag = 'internal scratch']
  %s0 = inlined_call_operand.vmem [shape: bf16[16,32], index: 0, kind: input, shape index: {}]
  %s1 = inlined_call_operand.vmem [shape: bf16[32,96], index: 1, kind: input, shape index: {}]
  %s2 = inlined_call_operand.vmem [shape: f32[1,96], index: 2, kind: input, shape index: {}]
  %s3 = inlined_call_operand.vmem [shape: bf16[16,96], index: 3, kind: output, shape index: {}]
  %s4 = sld [smem:[#allocation0]]
  $region22: #{encoder_forward.15} parent=0
    _
  %s6 = ssub.s32 1, %s4
  %s7 = scalar_select 0, %s6, %s4
  // Predicated region
  $region2: #{encoder_forward.15} parent=0 // pred_check
    _
  $region3: #{encoder_forward.15} parent=0 // pred_check_branch
    %9 = sbr.rel (0) target = $region5
  $region4: #{encoder_forward.15} parent=0 // pred_region
    _
  $region5: #{encoder_forward.15} parent=0 // pred_fallthru
    _
  // Predicated region
  $region6: #{encoder_forward.15} parent=0 // pred_check
    _
  $region7: #{encoder_forward.15} parent=0 // pred_check_branch
    %11 = sbr.rel (0) target = $region9
  $region8: #{encoder_forward.15} parent=0 // pred_region
    _
  $region9: #{encoder_forward.15} parent=0 // pred_fallthru
    _
  // Predicated region
  $region10: #{encoder_forward.15} parent=0 // pred_check
    _
  $region11: #{encoder_forward.15} parent=0 // pred_check_branch
    %13 = sbr.rel (0) target = $region13
  $region12: #{encoder_forward.15} parent=0 // pred_region
    _
  $region13: #{encoder_forward.15} parent=0 // pred_fallthru
    _
  %v15 = vld [vmem:[%s0] sm:$0xf]
  %v16 = vld [vmem:[%s0 + $0x4] sm:$0xf]
  %v17 = vld [vmem:[%s1] sm:$0xf]
  %v18 = vld [vmem:[%s1 + $0x4] sm:$0xf]
  %v19 = vld [vmem:[%s1 + $0x8] sm:$0xf]
  %v20 = vld [vmem:[%s1 + $0xc] sm:$0xf]
  %v21 = vld [vmem:[%s2] sm:$0x1]
  %v23 = vperm.slane %v21, 0
  %v27 = vunpack.c.l.b16 %v15
  %v28 = vunpack.c.l.b16 %v16
  %v29 = vpack.c.b16 %v28, %v27
  %v34 = vunpack.c.l.b16 %v17
  %v35 = vunpack.c.l.b16 %v18
  %v36 = vunpack.c.l.b16 %v19
  %v37 = vunpack.c.l.b16 %v20
  %v38 = vpack.c.b16 %v35, %v34
  %v39 = vpack.c.b16 %v37, %v36
  %vm42 = vcmask 261120
  %v44 = vsel %vm42, %v29, 0
  %46 = vmatpush.bf16.msra.mxu0 0
  %47 = vmatpush.bf16.msra.mxu0 0
  %48 = vmatpush.bf16.msra.mxu0 0
  %49 = vmatpush.bf16.msra.mxu0 0
  %50 = vmatpush.bf16.msra.mxu0 0
  %51 = vmatpush.bf16.msra.mxu0 0
  %52 = vmatpush.bf16.msra.mxu0 %v39
  %53 = vmatpush.bf16.msra.mxu0 %v38
  %54 = vmatmul.bf16.gmra.mxu0 %v44
  %v55 = vpop.f32.mrf.mxu0
  %v56 = vadd.f32 %v23, %v55
  %v57 = vpop.f32.mrf.mxu0
  %v58 = vadd.f32 %v23, %v57
  %59 = vdwg.mxu0
  %v60 = vpack.c.bf16 %v56, %v56
  %v61 = vpack.c.bf16 %v58, %v58
  %vm62 = vcmask 781312
  %63 = vst.msk [vmem:[%s3] sm:$0xf] %vm62, %v60
  %64 = vst.msk [vmem:[%s3 + $0x4] sm:$0xf] %vm62, %v61
  // Predicated region
  $region14: #{encoder_forward.15} parent=0 // pred_check
    _
  $region15: #{encoder_forward.15} parent=0 // pred_check_branch
    %66 = sbr.rel (0) target = $region17
  $region16: #{encoder_forward.15} parent=0 // pred_region
    _
  $region17: #{encoder_forward.15} parent=0 // pred_fallthru
    _
  // Predicated region
  $region18: #{encoder_forward.15} parent=0 // pred_check
    _
  $region19: #{encoder_forward.15} parent=0 // pred_check_branch
    %68 = sbr.rel (0) target = $region21
  $region20: #{encoder_forward.15} parent=0 // pred_region
    _
  $region21: #{encoder_forward.15} parent=0 // pred_fallthru
    _

// kernel: encoder_forward.17
$region0: #{encoder_forward.17}
  #allocation0 [shape = 'u32[]', space=smem, size = 0x4, offset = 0x4, fixed_abs, tag = 'smem constant byte address 0x4 - core index']
  #allocation1 [shape = 'u32[72,128]{1,0:T(1,128)}', space=vmem, size = 0x9000, scoped, tag = 'internal scratch']
  %s0 = inlined_call_operand.vmem [shape: bf16[16,32], index: 0, kind: input, shape index: {}]
  %s1 = inlined_call_operand.vmem [shape: bf16[16,32], index: 1, kind: input, shape index: {}]
  %s2 = inlined_call_operand.vmem [shape: bf16[32,32], index: 2, kind: input, shape index: {}]
  %s3 = inlined_call_operand.vmem [shape: f32[1,32], index: 3, kind: input, shape index: {}]
  %s4 = inlined_call_operand.vmem [shape: f32[1,32], index: 4, kind: input, shape index: {}]
  %s5 = inlined_call_operand.vmem [shape: f32[1,32], index: 5, kind: input, shape index: {}]
  %s6 = inlined_call_operand.vmem [shape: bf16[16,32], index: 6, kind: output, shape index: {}]
  %s7 = sld [smem:[#allocation0]]
  $region34: #{encoder_forward.17} parent=0
    _
  %s9 = ssub.s32 1, %s7
  %s10 = scalar_select 0, %s9, %s7
  // Predicated region
  $region2: #{encoder_forward.17} parent=0 // pred_check
    _
  $region3: #{encoder_forward.17} parent=0 // pred_check_branch
    %12 = sbr.rel (0) target = $region5
  $region4: #{encoder_forward.17} parent=0 // pred_region
    _
  $region5: #{encoder_forward.17} parent=0 // pred_fallthru
    _
  // Predicated region
  $region6: #{encoder_forward.17} parent=0 // pred_check
    _
  $region7: #{encoder_forward.17} parent=0 // pred_check_branch
    %14 = sbr.rel (0) target = $region9
  $region8: #{encoder_forward.17} parent=0 // pred_region
    _
  $region9: #{encoder_forward.17} parent=0 // pred_fallthru
    _
  // Predicated region
  $region10: #{encoder_forward.17} parent=0 // pred_check
    _
  $region11: #{encoder_forward.17} parent=0 // pred_check_branch
    %16 = sbr.rel (0) target = $region13
  $region12: #{encoder_forward.17} parent=0 // pred_region
    _
  $region13: #{encoder_forward.17} parent=0 // pred_fallthru
    _
  // Predicated region
  $region14: #{encoder_forward.17} parent=0 // pred_check
    _
  $region15: #{encoder_forward.17} parent=0 // pred_check_branch
    %18 = sbr.rel (0) target = $region17
  $region16: #{encoder_forward.17} parent=0 // pred_region
    _
  $region17: #{encoder_forward.17} parent=0 // pred_fallthru
    _
  // Predicated region
  $region18: #{encoder_forward.17} parent=0 // pred_check
    _
  $region19: #{encoder_forward.17} parent=0 // pred_check_branch
    %20 = sbr.rel (0) target = $region21
  $region20: #{encoder_forward.17} parent=0 // pred_region
    _
  $region21: #{encoder_forward.17} parent=0 // pred_fallthru
    _
  // Predicated region
  $region22: #{encoder_forward.17} parent=0 // pred_check
    _
  $region23: #{encoder_forward.17} parent=0 // pred_check_branch
    %22 = sbr.rel (0) target = $region25
  $region24: #{encoder_forward.17} parent=0 // pred_region
    _
  $region25: #{encoder_forward.17} parent=0 // pred_fallthru
    _
  %v24 = vld [vmem:[%s0] sm:$0xf]
  %v25 = vld [vmem:[%s0 + $0x4] sm:$0xf]
  %v26 = vld [vmem:[%s2] sm:$0xf]
  %v27 = vld [vmem:[%s2 + $0x4] sm:$0xf]
  %v28 = vld [vmem:[%s2 + $0x8] sm:$0xf]
  %v29 = vld [vmem:[%s2 + $0xc] sm:$0xf]
  %v30 = vld [vmem:[%s3] sm:$0x1]
  %v32 = vperm.slane %v30, 0
  %v36 = vunpack.c.l.b16 %v24
  %v37 = vunpack.c.l.b16 %v25
  %v38 = vpack.c.b16 %v37, %v36
  %v43 = vunpack.c.l.b16 %v26
  %v44 = vunpack.c.l.b16 %v27
  %v45 = vunpack.c.l.b16 %v28
  %v46 = vunpack.c.l.b16 %v29
  %v47 = vpack.c.b16 %v44, %v43
  %v48 = vpack.c.b16 %v46, %v45
  %vm51 = vcmask 261120
  %v53 = vsel %vm51, %v38, 0
  %55 = vmatpush.bf16.msra.mxu0 0
  %56 = vmatpush.bf16.msra.mxu0 0
  %57 = vmatpush.bf16.msra.mxu0 0
  %58 = vmatpush.bf16.msra.mxu0 0
  %59 = vmatpush.bf16.msra.mxu0 0
  %60 = vmatpush.bf16.msra.mxu0 0
  %61 = vmatpush.bf16.msra.mxu0 %v48
  %62 = vmatpush.bf16.msra.mxu0 %v47
  %63 = vmatmul.bf16.gmra.mxu0 %v53
  %v64 = vpop.f32.mrf.mxu0
  %v65 = vadd.f32 %v32, %v64
  %v66 = vpop.f32.mrf.mxu0
  %v67 = vadd.f32 %v32, %v66
  %68 = vdwg.mxu0
  %v69 = vld [vmem:[%s1] sm:$0xf]
  %v70 = vld [vmem:[%s1 + $0x4] sm:$0xf]
  %v71 = vunpack.c.l.bf16 %v69
  %v72 = vunpack.c.l.bf16 %v70
  %v73 = vadd.f32 %v65, %v71
  %v74 = vadd.f32 %v67, %v72
  %v75 = vsel %vm51, %v73, 0.0
  %76 = vadd.xlane.f32.xlu0 %v75
  %v77 = vpop.xlane.xlu0 %76
  %v78 = vsel %vm51, %v74, 0.0
  %79 = vadd.xlane.f32.xlu0 %v78
  %v80 = vpop.xlane.xlu0 %79
  %v81 = vrcp.pop 32.0
  %v82 = vmul.f32 32.0, %v81
  %v83 = vsub.f32 1.0, %v82
  %v84 = vmul.f32 %v81, %v83
  %v85 = vadd.f32 %v81, %v84
  %vm86 = vweird.f32 %v81
  %v87 = vsel %vm86, %v81, %v85
  %v88 = vmul.f32 %v77, %v87
  %v89 = vmul.f32 %v80, %v87
  %v90 = vsub.f32 %v73, %v88
  %v91 = vsub.f32 %v74, %v89
  %v92 = vmul.f32 %v90, %v90
  %v93 = vmul.f32 %v91, %v91
  %v94 = vsel %vm51, %v92, 0.0
  %95 = vadd.xlane.f32.xlu0 %v94
  %v96 = vpop.xlane.xlu0 %95
  %v97 = vsel %vm51, %v93, 0.0
  %98 = vadd.xlane.f32.xlu0 %v97
  %v99 = vpop.xlane.xlu0 %98
  %v100 = vmul.f32 %v96, %v87
  %v101 = vmul.f32 %v99, %v87
  %v102 = vadd.f32 %v100, 1e-05
  %v103 = vadd.f32 %v101, 1e-05
  %v104 = vrsqrt.pop %v102
  %v105 = vmul.f32 %v104, %v102
  %v106 = vmul.f32 %v105, %v104
  %v107 = vmul.f32 0.5, %v106
  %v108 = vsub.f32 1.5, %v107
  %v109 = vmul.f32 %v104, %v108
  %vm110 = vweird.f32 %v102
  %vm111 = vweird.f32 %v104
  %vm112 = vmor %vm110, %vm111
  %v113 = vsel %vm112, %v104, %v109
  %v114 = vrsqrt.pop %v103
  %v115 = vmul.f32 %v114, %v103
  %v116 = vmul.f32 %v115, %v114
  %v117 = vmul.f32 0.5, %v116
  %v118 = vsub.f32 1.5, %v117
  %v119 = vmul.f32 %v114, %v118
  %vm120 = vweird.f32 %v103
  %vm121 = vweird.f32 %v114
  %vm122 = vmor %vm120, %vm121
  %v123 = vsel %vm122, %v114, %v119
  %v124 = vmul.f32 %v90, %v113
  %v125 = vmul.f32 %v91, %v123
  %v126 = vld [vmem:[%s4] sm:$0x1]
  %v128 = vperm.slane %v126, 0
  %v130 = vmul.f32 %v124, %v128
  %v131 = vmul.f32 %v125, %v128
  %v132 = vld [vmem:[%s5] sm:$0x1]
  %v134 = vperm.slane %v132, 0
  %v136 = vadd.f32 %v130, %v134
  %v137 = vadd.f32 %v131, %v134
  %v138 = vpack.c.bf16 %v136, %v136
  %v139 = vpack.c.bf16 %v137, %v137
  %vm140 = vcmask 257024
  %141 = vst.msk [vmem:[%s6] sm:$0xf] %vm140, %v138
  %142 = vst.msk [vmem:[%s6 + $0x4] sm:$0xf] %vm140, %v139
  // Predicated region
  $region26: #{encoder_forward.17} parent=0 // pred_check
    _
  $region27: #{encoder_forward.17} parent=0 // pred_check_branch
    %144 = sbr.rel (0) target = $region29
  $region28: #{encoder_forward.17} parent=0 // pred_region
    _
  $region29: #{encoder_forward.17} parent=0 // pred_fallthru
    _
  // Predicated region
  $region30: #{encoder_forward.17} parent=0 // pred_check
    _
  $region31: #{encoder_forward.17} parent=0 // pred_check_branch
    %146 = sbr.rel (0) target = $region33
  $region32: #{encoder_forward.17} parent=0 // pred_region
    _
  $region33: #{encoder_forward.17} parent=0 // pred_fallthru
    _

// kernel: encoder_forward.18
$region0: #{encoder_forward.18}
  #allocation0 [shape = 'u32[]', space=smem, size = 0x4, offset = 0x4, fixed_abs, tag = 'smem constant byte address 0x4 - core index']
  #allocation1 [shape = 'u32[72,128]{1,0:T(1,128)}', space=vmem, size = 0x9000, scoped, tag = 'internal scratch']
  %s0 = inlined_call_operand.vmem [shape: bf16[16,32], index: 0, kind: input, shape index: {}]
  %s1 = inlined_call_operand.vmem [shape: bf16[32,64], index: 1, kind: input, shape index: {}]
  %s2 = inlined_call_operand.vmem [shape: f32[1,64], index: 2, kind: input, shape index: {}]
  %s3 = inlined_call_operand.vmem [shape: bf16[16,64], index: 3, kind: output, shape index: {}]
  %s4 = sld [smem:[#allocation0]]
  $region22: #{encoder_forward.18} parent=0
    _
  %s6 = ssub.s32 1, %s4
  %s7 = scalar_select 0, %s6, %s4
  // Predicated region
  $region2: #{encoder_forward.18} parent=0 // pred_check
    _
  $region3: #{encoder_forward.18} parent=0 // pred_check_branch
    %9 = sbr.rel (0) target = $region5
  $region4: #{encoder_forward.18} parent=0 // pred_region
    _
  $region5: #{encoder_forward.18} parent=0 // pred_fallthru
    _
  // Predicated region
  $region6: #{encoder_forward.18} parent=0 // pred_check
    _
  $region7: #{encoder_forward.18} parent=0 // pred_check_branch
    %11 = sbr.rel (0) target = $region9
  $region8: #{encoder_forward.18} parent=0 // pred_region
    _
  $region9: #{encoder_forward.18} parent=0 // pred_fallthru
    _
  // Predicated region
  $region10: #{encoder_forward.18} parent=0 // pred_check
    _
  $region11: #{encoder_forward.18} parent=0 // pred_check_branch
    %13 = sbr.rel (0) target = $region13
  $region12: #{encoder_forward.18} parent=0 // pred_region
    _
  $region13: #{encoder_forward.18} parent=0 // pred_fallthru
    _
  %v15 = vld [vmem:[%s0] sm:$0xf]
  %v16 = vld [vmem:[%s0 + $0x4] sm:$0xf]
  %v17 = vld [vmem:[%s1] sm:$0xf]
  %v18 = vld [vmem:[%s1 + $0x4] sm:$0xf]
  %v19 = vld [vmem:[%s1 + $0x8] sm:$0xf]
  %v20 = vld [vmem:[%s1 + $0xc] sm:$0xf]
  %v21 = vld [vmem:[%s2] sm:$0x1]
  %v23 = vperm.slane %v21, 0
  %v27 = vunpack.c.l.b16 %v15
  %v28 = vunpack.c.l.b16 %v16
  %v29 = vpack.c.b16 %v28, %v27
  %v34 = vunpack.c.l.b16 %v17
  %v35 = vunpack.c.l.b16 %v18
  %v36 = vunpack.c.l.b16 %v19
  %v37 = vunpack.c.l.b16 %v20
  %v38 = vpack.c.b16 %v35, %v34
  %v39 = vpack.c.b16 %v37, %v36
  %vm42 = vcmask 261120
  %v44 = vsel %vm42, %v29, 0
  %46 = vmatpush.bf16.msra.mxu0 0
  %47 = vmatpush.bf16.msra.mxu0 0
  %48 = vmatpush.bf16.msra.mxu0 0
  %49 = vmatpush.bf16.msra.mxu0 0
  %50 = vmatpush.bf16.msra.mxu0 0
  %51 = vmatpush.bf16.msra.mxu0 0
  %52 = vmatpush.bf16.msra.mxu0 %v39
  %53 = vmatpush.bf16.msra.mxu0 %v38
  %54 = vmatmul.bf16.gmra.mxu0 %v44
  %v55 = vpop.f32.mrf.mxu0
  %v56 = vadd.f32 %v23, %v55
  %v57 = vpop.f32.mrf.mxu0
  %v58 = vadd.f32 %v23, %v57
  %59 = vdwg.mxu0
  %v60 = vmul.f32 %v56, %v56
  %v61 = vmul.f32 %v58, %v58
  %v62 = vmul.f32 %v56, %v60
  %v63 = vmul.f32 %v58, %v61
  %v64 = vmul.f32 %v62, 0.044715
  %v65 = vmul.f32 %v63, 0.044715
  %v66 = vadd.f32 %v56, %v64
  %v67 = vadd.f32 %v58, %v65
  %v68 = vmul.f32 %v66, 0.7978846
  %v69 = vmul.f32 %v67, 0.7978846
  %v70 = vtanh.pop %v68
  %v71 = vtanh.pop %v69
  %v72 = vadd.f32 %v70, 1.0
  %v73 = vadd.f32 %v71, 1.0
  %v74 = vmul.f32 %v72, 0.5
  %v75 = vmul.f32 %v73, 0.5
  %v76 = vmul.f32 %v56, %v74
  %v77 = vmul.f32 %v58, %v75
  %v78 = vpack.c.bf16 %v76, %v76
  %v79 = vpack.c.bf16 %v77, %v77
  %vm80 = vcmask 519168
  %81 = vst.msk [vmem:[%s3] sm:$0xf] %vm80, %v78
  %82 = vst.msk [vmem:[%s3 + $0x4] sm:$0xf] %vm80, %v79
  // Predicated region
  $region14: #{encoder_forward.18} parent=0 // pred_check
    _
  $region15: #{encoder_forward.18} parent=0 // pred_check_branch
    %84 = sbr.rel (0) target = $region17
  $region16: #{encoder_forward.18} parent=0 // pred_region
    _
  $region17: #{encoder_forward.18} parent=0 // pred_fallthru
    _
  // Predicated region
  $region18: #{encoder_forward.18} parent=0 // pred_check
    _
  $region19: #{encoder_forward.18} parent=0 // pred_check_branch
    %86 = sbr.rel (0) target = $region21
  $region20: #{encoder_forward.18} parent=0 // pred_region
    _
  $region21: #{encoder_forward.18} parent=0 // pred_fallthru
    _

// kernel: encoder_forward.16
$region0: #{encoder_forward.16}
  #allocation0 [shape = 'u32[]', space=smem, size = 0x4, offset = 0x4, fixed_abs, tag = 'smem constant byte address 0x4 - core index']
  #allocation1 [shape = 'u32[72,128]{1,0:T(1,128)}', space=vmem, size = 0x9000, scoped, tag = 'internal scratch']
  #allocation2 [shape = 'f32[4,8,1]{2,1,0:T(8,128)}', space=vmem, size = 0x4000, scoped, tag = 'scratch operand']
  #allocation3 [shape = 'f32[4,8,1]{2,1,0:T(8,128)}', space=vmem, size = 0x4000, scoped, tag = 'scratch operand']
  #allocation4 [shape = 'f32[4,8,8]{2,1,0:T(8,128)}', space=vmem, size = 0x4000, scoped, tag = 'scratch operand']
  %s0 = inlined_call_operand.vmem [shape: bf16[2,4,8,8], index: 0, kind: input, shape index: {}]
  %s1 = inlined_call_operand.vmem [shape: bf16[2,4,8,8], index: 1, kind: input, shape index: {}]
  %s2 = inlined_call_operand.vmem [shape: bf16[2,4,8,8], index: 2, kind: input, shape index: {}]
  %s3 = inlined_call_operand.vmem [shape: bf16[2,8,32], index: 3, kind: output, shape index: {}]
  %s4 = sld [smem:[#allocation0]]
  $region53: #{encoder_forward.16} parent=0
    _
  %s6 = ssub.s32 1, %s4
  %s7 = scalar_select 0, %s6, %s4
  loop: start=0, step=1, limit=4
  $region2: #{encoder_forward.16} parent=0 // loop_pre_header
    _
  $region3: #{encoder_forward.16} parent=0 // loop_header
    %s9 = sphi 0, %s13
    %p10 = scmp.ge.s32.totalorder %s9, 4
    %s16 = sphi 0, %s35
    %s17 = sphi 0, %s31
    %s18 = sphi 0, %s27
    %s19 = sphi 0, %s16
    %s20 = sphi 0, %s17
    %s21 = sphi 0, %s18
    %s22 = sphi 0, %s19
    %s23 = sphi 0, %s20
    %s24 = sphi 0, %s21
    %s40 = sphi 0, %s42
    %s43 = sphi 0, %s40
    %s44 = sphi 0, %s43
    %s60 = sphi 0, %s44
    %s68 = sphi 0, %s70
    %s71 = sphi 0, %s68
    %s72 = sphi 0, %s71
    %s88 = sphi 0, %s72
    %s96 = sphi 0, %s98
    %s99 = sphi 0, %s96
    %s100 = sphi 0, %s99
    %s116 = sphi 0, %s100
    %s124 = sphi 0, %s126
    %s127 = sphi 0, %s124
    %s128 = sphi 0, %s127
    %s144 = sphi 0, %s128
  $region4: #{encoder_forward.16} parent=0 // loop_header_branch
    %12 = sbr.rel (%p10) target = $region8
  $region5: #{encoder_forward.16} parent=0 // loop_body
    %s14 = ssub.s32 %s9, 1
    %s15 = ssub.s32 %s9, 2
    %s25 = sadd.s32 1, %s18
    %p26 = scmp.ge.s32.totalorder %s25, 1
    %s27 = scalar_select %p26, 0, %s25
    %s28 = sadd.s32 1, %s17
    %s29 = scalar_select %p26, %s28, %s17
    %p30 = scmp.ge.s32.totalorder %s29, 1
    %s31 = scalar_select %p30, 0, %s29
    %s32 = sadd.s32 1, %s16
    %s33 = scalar_select %p30, %s32, %s16
    %p34 = scmp.ge.s32.totalorder %s33, 2
    %s35 = scalar_select %p34, 0, %s33
    %s36 = ssub.s32 %s16, %s35
    %s37 = ssub.s32 %s17, %s31
    %s38 = sor.u32 %s36, %s37
    %p39 = scmp.eq.s32.totalorder %s38, 0
    %s41 = sadd.s32 %s40, 1
    %s42 = scalar_select %p39, %s40, %s41
    %p45 = pneg %p39
    %p46 = scmp.eq.s32.totalorder %s9, 1
    %p47 = por %p45, %p46
    %p48 = scmp.ne.s32.totalorder %s40, %s43
    %p49 = scmp.eq.s32.totalorder %s9, 0
    %p50 = por %p48, %p49
    %p51 = scmp.ne.s32.totalorder %s40, %s43
    %p52 = scmp.eq.s32.totalorder %s14, 1
    %p53 = por %p51, %p52
    %p54 = scmp.ne.s32.totalorder %s43, %s44
    %p55 = scmp.eq.s32.totalorder %s14, 0
    %p56 = por %p54, %p55
    %p57 = scmp.ne.s32.totalorder %s43, %s44
    %p58 = scmp.eq.s32.totalorder %s15, 1
    %p59 = por %p57, %p58
    %p61 = scmp.ne.s32.totalorder %s44, %s60
    %p62 = scmp.eq.s32.totalorder %s15, 0
    %p63 = por %p61, %p62
    %s64 = ssub.s32 %s16, %s35
    %s65 = ssub.s32 %s18, %s27
    %s66 = sor.u32 %s64, %s65
    %p67 = scmp.eq.s32.totalorder %s66, 0
    %s69 = sadd.s32 %s68, 1
    %s70 = scalar_select %p67, %s68, %s69
    %p73 = pneg %p67
    %p74 = scmp.eq.s32.totalorder %s9, 1
    %p75 = por %p73, %p74
    %p76 = scmp.ne.s32.totalorder %s68, %s71
    %p77 = scmp.eq.s32.totalorder %s9, 0
    %p78 = por %p76, %p77
    %p79 = scmp.ne.s32.totalorder %s68, %s71
    %p80 = scmp.eq.s32.totalorder %s14, 1
    %p81 = por %p79, %p80
    %p82 = scmp.ne.s32.totalorder %s71, %s72
    %p83 = scmp.eq.s32.totalorder %s14, 0
    %p84 = por %p82, %p83
    %p85 = scmp.ne.s32.totalorder %s71, %s72
    %p86 = scmp.eq.s32.totalorder %s15, 1
    %p87 = por %p85, %p86
    %p89 = scmp.ne.s32.totalorder %s72, %s88
    %p90 = scmp.eq.s32.totalorder %s15, 0
    %p91 = por %p89, %p90
    %s92 = ssub.s32 %s16, %s35
    %s93 = ssub.s32 %s18, %s27
    %s94 = sor.u32 %s92, %s93
    %p95 = scmp.eq.s32.totalorder %s94, 0
    %s97 = sadd.s32 %s96, 1
    %s98 = scalar_select %p95, %s96, %s97
    %p101 = pneg %p95
    %p102 = scmp.eq.s32.totalorder %s9, 1
    %p103 = por %p101, %p102
    %p104 = scmp.ne.s32.totalorder %s96, %s99
    %p105 = scmp.eq.s32.totalorder %s9, 0
    %p106 = por %p104, %p105
    %p107 = scmp.ne.s32.totalorder %s96, %s99
    %p108 = scmp.eq.s32.totalorder %s14, 1
    %p109 = por %p107, %p108
    %p110 = scmp.ne.s32.totalorder %s99, %s100
    %p111 = scmp.eq.s32.totalorder %s14, 0
    %p112 = por %p110, %p111
    %p113 = scmp.ne.s32.totalorder %s99, %s100
    %p114 = scmp.eq.s32.totalorder %s15, 1
    %p115 = por %p113, %p114
    %p117 = scmp.ne.s32.totalorder %s100, %s116
    %p118 = scmp.eq.s32.totalorder %s15, 0
    %p119 = por %p117, %p118
    %s120 = ssub.s32 %s16, %s35
    %s121 = ssub.s32 %s17, %s31
    %s122 = sor.u32 %s120, %s121
    %p123 = scmp.eq.s32.totalorder %s122, 0
    %s125 = sadd.s32 %s124, 1
    %s126 = scalar_select %p123, %s124, %s125
    %p129 = pneg %p123
    %p130 = scmp.eq.s32.totalorder %s9, 1
    %p131 = por %p129, %p130
    %p132 = scmp.ne.s32.totalorder %s124, %s127
    %p133 = scmp.eq.s32.totalorder %s9, 0
    %p134 = por %p132, %p133
    %p135 = scmp.ne.s32.totalorder %s124, %s127
    %p136 = scmp.eq.s32.totalorder %s14, 1
    %p137 = por %p135, %p136
    %p138 = scmp.ne.s32.totalorder %s127, %s128
    %p139 = scmp.eq.s32.totalorder %s14, 0
    %p140 = por %p138, %p139
    %p141 = scmp.ne.s32.totalorder %s127, %s128
    %p142 = scmp.eq.s32.totalorder %s15, 1
    %p143 = por %p141, %p142
    %p145 = scmp.ne.s32.totalorder %s128, %s144
    %p146 = scmp.eq.s32.totalorder %s15, 0
    %p147 = por %p145, %p146
    %p148 = scmp.le.s32.totalorder 1, %s9
    %p149 = scmp.lt.s32.totalorder %s9, 3
    %p150 = pnand %p148, %p149
    %p151 = pneg %p150
    // Predicated region
    $region9: #{encoder_forward.16} parent=5 // pred_check
      _
    $region10: #{encoder_forward.16} parent=5 // pred_check_branch
      %153 = sbr.rel (%p150) target = $region12
    $region11: #{encoder_forward.16} parent=5 // pred_region
      %s154 = ssub.s32 %s9, 1
    $region12: #{encoder_forward.16} parent=5 // pred_fallthru
      _
    %p155 = scmp.lt.s32.totalorder %s9, 2
    // Predicated region
    $region13: #{encoder_forward.16} parent=5 // pred_check
      %p156 = pneg %p155
    $region14: #{encoder_forward.16} parent=5 // pred_check_branch
      %158 = sbr.rel (%p156) target = $region16
    $region15: #{encoder_forward.16} parent=5 // pred_region
      // Predicated region
      $region17: #{encoder_forward.16} parent=15 // pred_check
        %p159 = pneg %p50
      $region18: #{encoder_forward.16} parent=15 // pred_check_branch
        %161 = sbr.rel (%p159) target = $region20
      $region19: #{encoder_forward.16} parent=15 // pred_region
        %p162 = scmp.lt.s32.totalorder %s16, 1
        %s163 = scalar_select %p162, %s16, 1
        %p164 = scmp.lt.s32.totalorder %s17, 0
        %s165 = scalar_select %p164, %s17, 0
        %s166 = smul.addr %s163, 4
        %s167 = sadd.s32 %s165, %s166
        %s168 = smul.addr %s167, 4
        %s169 = scalar_lea.vmem %s0, %s168
      $region20: #{encoder_forward.16} parent=15 // pred_fallthru
        _
      // Predicated region
      $region21: #{encoder_forward.16} parent=15 // pred_check
        %p170 = pneg %p78
      $region22: #{encoder_forward.16} parent=15 // pred_check_branch
        %172 = sbr.rel (%p170) target = $region24
      $region23: #{encoder_forward.16} parent=15 // pred_region
        %p173 = scmp.lt.s32.totalorder %s16, 1
        %s174 = scalar_select %p173, %s16, 1
        %p175 = scmp.lt.s32.totalorder %s18, 0
        %s176 = scalar_select %p175, %s18, 0
        %s177 = smul.addr %s174, 4
        %s178 = sadd.s32 %s176, %s177
        %s179 = smul.addr %s178, 4
        %s180 = scalar_lea.vmem %s1, %s179
      $region24: #{encoder_forward.16} parent=15 // pred_fallthru
        _
      // Predicated region
      $region25: #{encoder_forward.16} parent=15 // pred_check
        %p181 = pneg %p106
      $region26: #{encoder_forward.16} parent=15 // pred_check_branch
        %183 = sbr.rel (%p181) target = $region28
      $region27: #{encoder_forward.16} parent=15 // pred_region
        %p184 = scmp.lt.s32.totalorder %s16, 1
        %s185 = scalar_select %p184, %s16, 1
        %p186 = scmp.lt.s32.totalorder %s18, 0
        %s187 = scalar_select %p186, %s18, 0
        %s188 = smul.addr %s185, 4
        %s189 = sadd.s32 %s187, %s188
        %s190 = smul.addr %s189, 4
        %s191 = scalar_lea.vmem %s2, %s190
      $region28: #{encoder_forward.16} parent=15 // pred_fallthru
        _
    $region16: #{encoder_forward.16} parent=5 // pred_fallthru
      _
    %p192 = scmp.le.s32.totalorder 1, %s9
    %p193 = scmp.lt.s32.totalorder %s9, 3
    %p194 = pnand %p192, %p193
    %p195 = pneg %p194
    // Predicated region
    $region29: #{encoder_forward.16} parent=5 // pred_check
      _
    $region30: #{encoder_forward.16} parent=5 // pred_check_branch
      %197 = sbr.rel (%p194) target = $region32
    $region31: #{encoder_forward.16} parent=5 // pred_region
      %s198 = ssub.s32 %s9, 1
      %p199 = scmp.lt.s32.totalorder %s19, 1
      %s200 = scalar_select %p199, %s19, 1
      %p201 = scmp.lt.s32.totalorder %s20, 0
      %s202 = scalar_select %p201, %s20, 0
      %s203 = smul.addr %s200, 4
      %s204 = sadd.s32 %s202, %s203
      %s205 = smul.addr %s204, 4
      %s206 = scalar_lea.vmem %s0, %s205
      %p207 = pneg %p56
      %p208 = pneg %p53
      %p209 = scmp.lt.s32.totalorder %s19, 1
      %s210 = scalar_select %p209, %s19, 1
      %p211 = scmp.lt.s32.totalorder %s21, 0
      %s212 = scalar_select %p211, %s21, 0
      %s213 = smul.addr %s210, 4
      %s214 = sadd.s32 %s212, %s213
      %s215 = smul.addr %s214, 4
      %s216 = scalar_lea.vmem %s1, %s215
      %p217 = pneg %p84
      %p218 = pneg %p81
      %p219 = scmp.lt.s32.totalorder %s19, 1
      %s220 = scalar_select %p219, %s19, 1
      %p221 = scmp.lt.s32.totalorder %s21, 0
      %s222 = scalar_select %p221, %s21, 0
      %s223 = smul.addr %s220, 4
      %s224 = sadd.s32 %s222, %s223
      %s225 = smul.addr %s224, 4
      %s226 = scalar_lea.vmem %s2, %s225
      %p227 = pneg %p112
      %p228 = pneg %p109
      %p229 = pneg %p140
      %p230 = pneg %p137
      %p231 = scmp.lt.s32.totalorder %s19, 1
      %s232 = scalar_select %p231, %s19, 1
      %p233 = scmp.lt.s32.totalorder %s20, 0
      %s234 = scalar_select %p233, %s20, 0
      %s235 = sadd.s32 %s234, %s232
      %s236 = smul.addr %s235, 4
      %s237 = scalar_lea.vmem %s3, %s236
      %p238 = scmp.lt.s32.totalorder %s19, 1
      %s239 = scalar_select %p238, %s19, 1
      %p240 = scmp.lt.s32.totalorder %s20, 0
      %s241 = scalar_select %p240, %s20, 0
      %s242 = smul.addr %s239, 4
      %s243 = sadd.s32 %s241, %s242
      %s244 = smul.addr %s243, 4
      %s245 = scalar_lea.vmem %s0, %s244
      %p246 = scmp.lt.s32.totalorder %s19, 1
      %s247 = scalar_select %p246, %s19, 1
      %p248 = scmp.lt.s32.totalorder %s21, 0
      %s249 = scalar_select %p248, %s21, 0
      %s250 = smul.addr %s247, 4
      %s251 = sadd.s32 %s249, %s250
      %s252 = smul.addr %s251, 4
      %s253 = scalar_lea.vmem %s1, %s252
      %p254 = scmp.lt.s32.totalorder %s19, 1
      %s255 = scalar_select %p254, %s19, 1
      %p256 = scmp.lt.s32.totalorder %s21, 0
      %s257 = scalar_select %p256, %s21, 0
      %s258 = smul.addr %s255, 4
      %s259 = sadd.s32 %s257, %s258
      %s260 = smul.addr %s259, 4
      %s261 = scalar_lea.vmem %s2, %s260
      %p262 = scmp.lt.s32.totalorder %s19, 1
      %s263 = scalar_select %p262, %s19, 1
      %p264 = scmp.lt.s32.totalorder %s20, 0
      %s265 = scalar_select %p264, %s20, 0
      %s266 = sadd.s32 %s265, %s263
      %s267 = smul.addr %s266, 4
      %s268 = scalar_lea.vmem %s3, %s267
      %p270 = scmp.eq.s32.totalorder %s21, 0
      // Predicated region
      $region33: #{encoder_forward.16} parent=31 // pred_check
        %p271 = pneg %p270
      $region34: #{encoder_forward.16} parent=31 // pred_check_branch
        %273 = sbr.rel (%p271) target = $region36
      $region35: #{encoder_forward.16} parent=31 // pred_region
        %vm274 = vcmask 7168
        %275 = vst.msk [vmem:[#allocation2] sm:$0xff] %vm274, -inf
        %276 = vst.msk [vmem:[#allocation2 + $0x8] sm:$0xff] %vm274, -inf
        %277 = vst.msk [vmem:[#allocation2 + $0x10] sm:$0xff] %vm274, -inf
        %278 = vst.msk [vmem:[#allocation2 + $0x18] sm:$0xff] %vm274, -inf
        %279 = vst.msk [vmem:[#allocation3] sm:$0xff] %vm274, 0.0
        %280 = vst.msk [vmem:[#allocation3 + $0x8] sm:$0xff] %vm274, 0.0
        %281 = vst.msk [vmem:[#allocation3 + $0x10] sm:$0xff] %vm274, 0.0
        %282 = vst.msk [vmem:[#allocation3 + $0x18] sm:$0xff] %vm274, 0.0
        %vm283 = vcmask 64512
        %284 = vst.msk [vmem:[#allocation4] sm:$0xff] %vm283, 0.0
        %285 = vst.msk [vmem:[#allocation4 + $0x8] sm:$0xff] %vm283, 0.0
        %286 = vst.msk [vmem:[#allocation4 + $0x10] sm:$0xff] %vm283, 0.0
        %287 = vst.msk [vmem:[#allocation4 + $0x18] sm:$0xff] %vm283, 0.0
      $region36: #{encoder_forward.16} parent=31 // pred_fallthru
        _
      %v288 = vld [vmem:[%s245] sm:$0xf]
      %v289 = vld [vmem:[%s245 + $0x4] sm:$0xf]
      %v290 = vld [vmem:[%s245 + $0x8] sm:$0xf]
      %v291 = vld [vmem:[%s245 + $0xc] sm:$0xf]
      %v292 = vld [vmem:[%s253] sm:$0xf]
      %v293 = vld [vmem:[%s253 + $0x4] sm:$0xf]
      %v294 = vld [vmem:[%s253 + $0x8] sm:$0xf]
      %v295 = vld [vmem:[%s253 + $0xc] sm:$0xf]
      %v296 = vld [vmem:[%s261] sm:$0xf]
      %v297 = vld [vmem:[%s261 + $0x4] sm:$0xf]
      %v298 = vld [vmem:[%s261 + $0x8] sm:$0xf]
      %v299 = vld [vmem:[%s261 + $0xc] sm:$0xf]
      %vm300 = vcmask 64512
      %v302 = vsel %vm300, %v288, 0
      %v305 = vsel %vm300, %v292, 0
      %307 = vmatpush.bf16.xpose.msra.mxu0 0
      %308 = vmatpush.bf16.xpose.msra.mxu0 0
      %309 = vmatpush.bf16.xpose.msra.mxu0 0
      %310 = vmatpush.bf16.xpose.msra.mxu0 0
      %311 = vmatpush.bf16.xpose.msra.mxu0 0
      %312 = vmatpush.bf16.xpose.msra.mxu0 0
      %313 = vmatpush.bf16.xpose.msra.mxu0 0
      %314 = vmatpush.bf16.xpose.msra.mxu0 %v305
      %315 = vmatmul.bf16.gmra.mxu0 %v302
      %v316 = vpop.f32.mrf.mxu0
      %v317 = vadd.f32 0.0, %v316
      %v318 = vpop.f32.mrf.mxu0
      %319 = vdwg.mxu0
      %v321 = vsel %vm300, %v289, 0
      %v324 = vsel %vm300, %v293, 0
      %326 = vmatpush.bf16.xpose.msra.mxu0 0
      %327 = vmatpush.bf16.xpose.msra.mxu0 0
      %328 = vmatpush.bf16.xpose.msra.mxu0 0
      %329 = vmatpush.bf16.xpose.msra.mxu0 0
      %330 = vmatpush.bf16.xpose.msra.mxu0 0
      %331 = vmatpush.bf16.xpose.msra.mxu0 0
      %332 = vmatpush.bf16.xpose.msra.mxu0 0
      %333 = vmatpush.bf16.xpose.msra.mxu0 %v324
      %334 = vmatmul.bf16.gmra.mxu0 %v321
      %v335 = vpop.f32.mrf.mxu0
      %v336 = vadd.f32 0.0, %v335
      %v337 = vpop.f32.mrf.mxu0
      %338 = vdwg.mxu0
      %v340 = vsel %vm300, %v290, 0
      %v343 = vsel %vm300, %v294, 0
      %345 = vmatpush.bf16.xpose.msra.mxu0 0
      %346 = vmatpush.bf16.xpose.msra.mxu0 0
      %347 = vmatpush.bf16.xpose.msra.mxu0 0
      %348 = vmatpush.bf16.xpose.msra.mxu0 0
      %349 = vmatpush.bf16.xpose.msra.mxu0 0
      %350 = vmatpush.bf16.xpose.msra.mxu0 0
      %351 = vmatpush.bf16.xpose.msra.mxu0 0
      %352 = vmatpush.bf16.xpose.msra.mxu0 %v343
      %353 = vmatmul.bf16.gmra.mxu0 %v340
      %v354 = vpop.f32.mrf.mxu0
      %v355 = vadd.f32 0.0, %v354
      %v356 = vpop.f32.mrf.mxu0
      %357 = vdwg.mxu0
      %v359 = vsel %vm300, %v291, 0
      %v362 = vsel %vm300, %v295, 0
      %364 = vmatpush.bf16.xpose.msra.mxu0 0
      %365 = vmatpush.bf16.xpose.msra.mxu0 0
      %366 = vmatpush.bf16.xpose.msra.mxu0 0
      %367 = vmatpush.bf16.xpose.msra.mxu0 0
      %368 = vmatpush.bf16.xpose.msra.mxu0 0
      %369 = vmatpush.bf16.xpose.msra.mxu0 0
      %370 = vmatpush.bf16.xpose.msra.mxu0 0
      %371 = vmatpush.bf16.xpose.msra.mxu0 %v362
      %372 = vmatmul.bf16.gmra.mxu0 %v359
      %v373 = vpop.f32.mrf.mxu0
      %v374 = vadd.f32 0.0, %v373
      %v375 = vpop.f32.mrf.mxu0
      %376 = vdwg.mxu0
      %v377 = vmul.f32 %v317, 0.35355338
      %v378 = vmul.f32 %v336, 0.35355338
      %v379 = vmul.f32 %v355, 0.35355338
      %v380 = vmul.f32 %v374, 0.35355338
      %v381 = vld [vmem:[#allocation2] sm:$0xff]
      %v382 = vld [vmem:[#allocation2 + $0x8] sm:$0xff]
      %v383 = vld [vmem:[#allocation2 + $0x10] sm:$0xff]
      %v384 = vld [vmem:[#allocation2 + $0x18] sm:$0xff]
      %v385 = vsel %vm300, %v377, -inf
      %386 = vmax.xlane.f32.xlu0 %v385
      %v387 = vpop.xlane.xlu0 %386
      %v388 = vsel %vm300, %v378, -inf
      %389 = vmax.xlane.f32.xlu0 %v388
      %v390 = vpop.xlane.xlu0 %389
      %v391 = vsel %vm300, %v379, -inf
      %392 = vmax.xlane.f32.xlu0 %v391
      %v393 = vpop.xlane.xlu0 %392
      %v394 = vsel %vm300, %v380, -inf
      %395 = vmax.xlane.f32.xlu0 %v394
      %v396 = vpop.xlane.xlu0 %395
      %v397 = vmax.f32 %v381, %v387
      %v398 = vmax.f32 %v382, %v390
      %v399 = vmax.f32 %v383, %v393
      %v400 = vmax.f32 %v384, %v396
      %v401 = vsub.f32 %v381, %v397
      %v402 = vsub.f32 %v382, %v398
      %v403 = vsub.f32 %v383, %v399
      %v404 = vsub.f32 %v384, %v400
      %v405 = vmul.f32 %v401, 1.442695
      %v406 = vpow.pop %v405
      %v407 = vmul.f32 %v402, 1.442695
      %v408 = vpow.pop %v407
      %v409 = vmul.f32 %v403, 1.442695
      %v410 = vpow.pop %v409
      %v411 = vmul.f32 %v404, 1.442695
      %v412 = vpow.pop %v411
      %414 = vset.pattern.permute.xlu0 0
      %415 = vperm.xlu0 %414, %v397
      %v416 = vpop.permute.xlu0 %415
      %419 = vset.pattern.permute.xlu0 0
      %420 = vperm.xlu0 %419, %v398
      %v421 = vpop.permute.xlu0 %420
      %424 = vset.pattern.permute.xlu0 0
      %425 = vperm.xlu0 %424, %v399
      %v426 = vpop.permute.xlu0 %425
      %429 = vset.pattern.permute.xlu0 0
      %430 = vperm.xlu0 %429, %v400
      %v431 = vpop.permute.xlu0 %430
      %v433 = vsub.f32 %v377, %v416
      %v434 = vsub.f32 %v378, %v421
      %v435 = vsub.f32 %v379, %v426
      %v436 = vsub.f32 %v380, %v431
      %v437 = vmul.f32 %v433, 1.442695
      %v438 = vpow.pop %v437
      %v439 = vmul.f32 %v434, 1.442695
      %v440 = vpow.pop %v439
      %v441 = vmul.f32 %v435, 1.442695
      %v442 = vpow.pop %v441
      %v443 = vmul.f32 %v436, 1.442695
      %v444 = vpow.pop %v443
      %v445 = vld [vmem:[#allocation3] sm:$0xff]
      %v446 = vld [vmem:[#allocation3 + $0x8] sm:$0xff]
      %v447 = vld [vmem:[#allocation3 + $0x10] sm:$0xff]
      %v448 = vld [vmem:[#allocation3 + $0x18] sm:$0xff]
      %v449 = vmul.f32 %v406, %v445
      %v450 = vmul.f32 %v408, %v446
      %v451 = vmul.f32 %v410, %v447
      %v452 = vmul.f32 %v412, %v448
      %v453 = vsel %vm300, %v438, 0.0
      %454 = vadd.xlane.f32.xlu0 %v453
      %v455 = vpop.xlane.xlu0 %454
      %v456 = vsel %vm300, %v440, 0.0
      %457 = vadd.xlane.f32.xlu0 %v456
      %v458 = vpop.xlane.xlu0 %457
      %v459 = vsel %vm300, %v442, 0.0
      %460 = vadd.xlane.f32.xlu0 %v459
      %v461 = vpop.xlane.xlu0 %460
      %v462 = vsel %vm300, %v444, 0.0
      %463 = vadd.xlane.f32.xlu0 %v462
      %v464 = vpop.xlane.xlu0 %463
      %v465 = vadd.f32 %v449, %v455
      %v466 = vadd.f32 %v450, %v458
      %v467 = vadd.f32 %v451, %v461
      %v468 = vadd.f32 %v452, %v464
      %vm469 = vcmask 7168
      %470 = vst.msk [vmem:[#allocation3] sm:$0xff] %vm469, %v465
      %471 = vst.msk [vmem:[#allocation3 + $0x8] sm:$0xff] %vm469, %v466
      %472 = vst.msk [vmem:[#allocation3 + $0x10] sm:$0xff] %vm469, %v467
      %473 = vst.msk [vmem:[#allocation3 + $0x18] sm:$0xff] %vm469, %v468
      %v474 = vld [vmem:[#allocation4] sm:$0xff]
      %v475 = vld [vmem:[#allocation4 + $0x8] sm:$0xff]
      %v476 = vld [vmem:[#allocation4 + $0x10] sm:$0xff]
      %v477 = vld [vmem:[#allocation4 + $0x18] sm:$0xff]
      %479 = vset.pattern.permute.xlu0 0
      %480 = vperm.xlu0 %479, %v406
      %v481 = vpop.permute.xlu0 %480
      %484 = vset.pattern.permute.xlu0 0
      %485 = vperm.xlu0 %484, %v408
      %v486 = vpop.permute.xlu0 %485
      %489 = vset.pattern.permute.xlu0 0
      %490 = vperm.xlu0 %489, %v410
      %v491 = vpop.permute.xlu0 %490
      %494 = vset.pattern.permute.xlu0 0
      %495 = vperm.xlu0 %494, %v412
      %v496 = vpop.permute.xlu0 %495
      %v498 = vmul.f32 %v481, %v474
      %v499 = vmul.f32 %v486, %v475
      %v500 = vmul.f32 %v491, %v476
      %v501 = vmul.f32 %v496, %v477
      %v502 = vpack.c.bf16 %v438, %v438
      %v503 = vpack.c.bf16 %v440, %v440
      %v504 = vpack.c.bf16 %v442, %v442
      %v505 = vpack.c.bf16 %v444, %v444
      %v507 = vsel %vm300, %v502, 0
      %vm509 = vcmask 1043456
      %v511 = vsel %vm509, %v296, 0
      %513 = vmatpush.bf16.msra.mxu0 0
      %514 = vmatpush.bf16.msra.mxu0 0
      %515 = vmatpush.bf16.msra.mxu0 0
      %516 = vmatpush.bf16.msra.mxu0 0
      %517 = vmatpush.bf16.msra.mxu0 0
      %518 = vmatpush.bf16.msra.mxu0 0
      %519 = vmatpush.bf16.msra.mxu0 0
      %520 = vmatpush.bf16.msra.mxu0 %v511
      %521 = vmatmul.bf16.gmra.mxu0 %v507
      %v522 = vpop.f32.mrf.mxu0
      %v523 = vadd.f32 0.0, %v522
      %v524 = vpop.f32.mrf.mxu0
      %525 = vdwg.mxu0
      %v527 = vsel %vm300, %v503, 0
      %v530 = vsel %vm509, %v297, 0
      %532 = vmatpush.bf16.msra.mxu0 0
      %533 = vmatpush.bf16.msra.mxu0 0
      %534 = vmatpush.bf16.msra.mxu0 0
      %535 = vmatpush.bf16.msra.mxu0 0
      %536 = vmatpush.bf16.msra.mxu0 0
      %537 = vmatpush.bf16.msra.mxu0 0
      %538 = vmatpush.bf16.msra.mxu0 0
      %539 = vmatpush.bf16.msra.mxu0 %v530
      %540 = vmatmul.bf16.gmra.mxu0 %v527
      %v541 = vpop.f32.mrf.mxu0
      %v542 = vadd.f32 0.0, %v541
      %v543 = vpop.f32.mrf.mxu0
      %544 = vdwg.mxu0
      %v546 = vsel %vm300, %v504, 0
      %v549 = vsel %vm509, %v298, 0
      %551 = vmatpush.bf16.msra.mxu0 0
      %552 = vmatpush.bf16.msra.mxu0 0
      %553 = vmatpush.bf16.msra.mxu0 0
      %554 = vmatpush.bf16.msra.mxu0 0
      %555 = vmatpush.bf16.msra.mxu0 0
      %556 = vmatpush.bf16.msra.mxu0 0
      %557 = vmatpush.bf16.msra.mxu0 0
      %558 = vmatpush.bf16.msra.mxu0 %v549
      %559 = vmatmul.bf16.gmra.mxu0 %v546
      %v560 = vpop.f32.mrf.mxu0
      %v561 = vadd.f32 0.0, %v560
      %v562 = vpop.f32.mrf.mxu0
      %563 = vdwg.mxu0
      %v565 = vsel %vm300, %v505, 0
      %v568 = vsel %vm509, %v299, 0
      %570 = vmatpush.bf16.msra.mxu0 0
      %571 = vmatpush.bf16.msra.mxu0 0
      %572 = vmatpush.bf16.msra.mxu0 0
      %573 = vmatpush.bf16.msra.mxu0 0
      %574 = vmatpush.bf16.msra.mxu0 0
      %575 = vmatpush.bf16.msra.mxu0 0
      %576 = vmatpush.bf16.msra.mxu0 0
      %577 = vmatpush.bf16.msra.mxu0 %v568
      %578 = vmatmul.bf16.gmra.mxu0 %v565
      %v579 = vpop.f32.mrf.mxu0
      %v580 = vadd.f32 0.0, %v579
      %v581 = vpop.f32.mrf.mxu0
      %582 = vdwg.mxu0
      %v583 = vadd.f32 %v498, %v523
      %v584 = vadd.f32 %v499, %v542
      %v585 = vadd.f32 %v500, %v561
      %v586 = vadd.f32 %v501, %v580
      %587 = vst.msk [vmem:[#allocation4] sm:$0xff] %vm300, %v583
      %588 = vst.msk [vmem:[#allocation4 + $0x8] sm:$0xff] %vm300, %v584
      %589 = vst.msk [vmem:[#allocation4 + $0x10] sm:$0xff] %vm300, %v585
      %590 = vst.msk [vmem:[#allocation4 + $0x18] sm:$0xff] %vm300, %v586
      %591 = vst.msk [vmem:[#allocation2] sm:$0xff] %vm469, %v397
      %592 = vst.msk [vmem:[#allocation2 + $0x8] sm:$0xff] %vm469, %v398
      %593 = vst.msk [vmem:[#allocation2 + $0x10] sm:$0xff] %vm469, %v399
      %594 = vst.msk [vmem:[#allocation2 + $0x18] sm:$0xff] %vm469, %v400
      // Predicated region
      $region37: #{encoder_forward.16} parent=31 // pred_check
        %p595 = pneg %p270
      $region38: #{encoder_forward.16} parent=31 // pred_check_branch
        %597 = sbr.rel (%p595) target = $region40
      $region39: #{encoder_forward.16} parent=31 // pred_region
        %v598 = vld [vmem:[#allocation3] sm:$0xff]
        %v599 = vld [vmem:[#allocation3 + $0x8] sm:$0xff]
        %v600 = vld [vmem:[#allocation3 + $0x10] sm:$0xff]
        %v601 = vld [vmem:[#allocation3 + $0x18] sm:$0xff]
        %v602 = vrcp.pop %v598
        %v603 = vrcp.pop %v599
        %v604 = vrcp.pop %v600
        %v605 = vrcp.pop %v601
        %v606 = vld [vmem:[#allocation4] sm:$0xff]
        %v607 = vld [vmem:[#allocation4 + $0x8] sm:$0xff]
        %v608 = vld [vmem:[#allocation4 + $0x10] sm:$0xff]
        %v609 = vld [vmem:[#allocation4 + $0x18] sm:$0xff]
        %611 = vset.pattern.permute.xlu0 0
        %612 = vperm.xlu0 %611, %v602
        %v613 = vpop.permute.xlu0 %612
        %616 = vset.pattern.permute.xlu0 0
        %617 = vperm.xlu0 %616, %v603
        %v618 = vpop.permute.xlu0 %617
        %621 = vset.pattern.permute.xlu0 0
        %622 = vperm.xlu0 %621, %v604
        %v623 = vpop.permute.xlu0 %622
        %626 = vset.pattern.permute.xlu0 0
        %627 = vperm.xlu0 %626, %v605
        %v628 = vpop.permute.xlu0 %627
        %v630 = vmul.f32 %v606, %v613
        %v631 = vmul.f32 %v607, %v618
        %v632 = vmul.f32 %v608, %v623
        %v633 = vmul.f32 %v609, %v628
        %635 = vrot.lane.b32.xlu0 %v631, 8
        %v636 = vpop.permute.xlu0 %635
        %639 = vrot.lane.b32.xlu0 %v632, 16
        %v640 = vpop.permute.xlu0 %639
        %643 = vrot.lane.b32.xlu0 %v633, 24
        %v644 = vpop.permute.xlu0 %643
        %v646 = vsel %vm300, %v630, %v636
        %vm647 = vcmask 130048
        %v648 = vsel %vm647, %v646, %v640
        %vm649 = vcmask 195584
        %v650 = vsel %vm649, %v648, %v644
        %v651 = vpack.c.bf16 %v650, %v650
        %vm652 = vcmask 257024
        %653 = vst.msk [vmem:[%s268] sm:$0xf] %vm652, %v651
      $region40: #{encoder_forward.16} parent=31 // pred_fallthru
        _
      %p654 = scmp.lt.s32.totalorder %s19, 1
      %s655 = scalar_select %p654, %s19, 1
      %p656 = scmp.lt.s32.totalorder %s20, 0
      %s657 = scalar_select %p656, %s20, 0
      %s658 = sadd.s32 %s657, %s655
      %s659 = smul.addr %s658, 4
      %s660 = scalar_lea.vmem %s3, %s659
      // Predicated region
      $region41: #{encoder_forward.16} parent=31 // pred_check
        %p661 = pneg %p137
      $region42: #{encoder_forward.16} parent=31 // pred_check_branch
        %663 = sbr.rel (%p661) target = $region44
      $region43: #{encoder_forward.16} parent=31 // pred_region
        _
      $region44: #{encoder_forward.16} parent=31 // pred_fallthru
        _
    $region32: #{encoder_forward.16} parent=5 // pred_fallthru
      _
    %p664 = scmp.le.s32.totalorder 2, %s9
    // Predicated region
    $region45: #{encoder_forward.16} parent=5 // pred_check
      %p665 = pneg %p664
    $region46: #{encoder_forward.16} parent=5 // pred_check_branch
      %667 = sbr.rel (%p665) target = $region48
    $region47: #{encoder_forward.16} parent=5 // pred_region
      %s668 = ssub.s32 %s9, 2
      // Predicated region
      $region49: #{encoder_forward.16} parent=47 // pred_check
        %p669 = pneg %p143
      $region50: #{encoder_forward.16} parent=47 // pred_check_branch
        %671 = sbr.rel (%p669) target = $region52
      $region51: #{encoder_forward.16} parent=47 // pred_region
        %p672 = scmp.lt.s32.totalorder %s22, 1
        %s673 = scalar_select %p672, %s22, 1
        %p674 = scmp.lt.s32.totalorder %s23, 0
        %s675 = scalar_select %p674, %s23, 0
        %s676 = sadd.s32 %s675, %s673
        %s677 = smul.addr %s676, 4
        %s678 = scalar_lea.vmem %s3, %s677
      $region52: #{encoder_forward.16} parent=47 // pred_fallthru
        _
    $region48: #{encoder_forward.16} parent=5 // pred_fallthru
      _
  $region6: #{encoder_forward.16} parent=0 // loop_footer
    %s13 = sadd.s32 1, %s9
  $region7: #{encoder_forward.16} parent=0 // loop_footer_branch
    %8 = sbr.rel target = $region3
  $region8: #{encoder_forward.16} parent=0 // loop_exit
    _

// kernel: encoder_forward.19
$region0: #{encoder_forward.19}
  #allocation0 [shape = 'u32[]', space=smem, size = 0x4, offset = 0x4, fixed_abs, tag = 'smem constant byte address 0x4 - core index']
  #allocation1 [shape = 'u32[72,128]{1,0:T(1,128)}', space=vmem, size = 0x9000, scoped, tag = 'internal scratch']
  %s0 = inlined_call_operand.vmem [shape: bf16[16,64], index: 0, kind: input, shape index: {}]
  %s1 = inlined_call_operand.vmem [shape: bf16[16,32], index: 1, kind: input, shape index: {}]
  %s2 = inlined_call_operand.vmem [shape: bf16[64,32], index: 2, kind: input, shape index: {}]
  %s3 = inlined_call_operand.vmem [shape: f32[1,32], index: 3, kind: input, shape index: {}]
  %s4 = inlined_call_operand.vmem [shape: f32[1,32], index: 4, kind: input, shape index: {}]
  %s5 = inlined_call_operand.vmem [shape: f32[1,32], index: 5, kind: input, shape index: {}]
  %s6 = inlined_call_operand.vmem [shape: bf16[16,32], index: 6, kind: output, shape index: {}]
  %s7 = sld [smem:[#allocation0]]
  $region34: #{encoder_forward.19} parent=0
    _
  %s9 = ssub.s32 1, %s7
  %s10 = scalar_select 0, %s9, %s7
  // Predicated region
  $region2: #{encoder_forward.19} parent=0 // pred_check
    _
  $region3: #{encoder_forward.19} parent=0 // pred_check_branch
    %12 = sbr.rel (0) target = $region5
  $region4: #{encoder_forward.19} parent=0 // pred_region
    _
  $region5: #{encoder_forward.19} parent=0 // pred_fallthru
    _
  // Predicated region
  $region6: #{encoder_forward.19} parent=0 // pred_check
    _
  $region7: #{encoder_forward.19} parent=0 // pred_check_branch
    %14 = sbr.rel (0) target = $region9
  $region8: #{encoder_forward.19} parent=0 // pred_region
    _
  $region9: #{encoder_forward.19} parent=0 // pred_fallthru
    _
  // Predicated region
  $region10: #{encoder_forward.19} parent=0 // pred_check
    _
  $region11: #{encoder_forward.19} parent=0 // pred_check_branch
    %16 = sbr.rel (0) target = $region13
  $region12: #{encoder_forward.19} parent=0 // pred_region
    _
  $region13: #{encoder_forward.19} parent=0 // pred_fallthru
    _
  // Predicated region
  $region14: #{encoder_forward.19} parent=0 // pred_check
    _
  $region15: #{encoder_forward.19} parent=0 // pred_check_branch
    %18 = sbr.rel (0) target = $region17
  $region16: #{encoder_forward.19} parent=0 // pred_region
    _
  $region17: #{encoder_forward.19} parent=0 // pred_fallthru
    _
  // Predicated region
  $region18: #{encoder_forward.19} parent=0 // pred_check
    _
  $region19: #{encoder_forward.19} parent=0 // pred_check_branch
    %20 = sbr.rel (0) target = $region21
  $region20: #{encoder_forward.19} parent=0 // pred_region
    _
  $region21: #{encoder_forward.19} parent=0 // pred_fallthru
    _
  // Predicated region
  $region22: #{encoder_forward.19} parent=0 // pred_check
    _
  $region23: #{encoder_forward.19} parent=0 // pred_check_branch
    %22 = sbr.rel (0) target = $region25
  $region24: #{encoder_forward.19} parent=0 // pred_region
    _
  $region25: #{encoder_forward.19} parent=0 // pred_fallthru
    _
  %v24 = vld [vmem:[%s0] sm:$0xf]
  %v25 = vld [vmem:[%s0 + $0x4] sm:$0xf]
  %v26 = vld [vmem:[%s2] sm:$0xf]
  %v27 = vld [vmem:[%s2 + $0x4] sm:$0xf]
  %v28 = vld [vmem:[%s2 + $0x8] sm:$0xf]
  %v29 = vld [vmem:[%s2 + $0xc] sm:$0xf]
  %v30 = vld [vmem:[%s2 + $0x10] sm:$0xf]
  %v31 = vld [vmem:[%s2 + $0x14] sm:$0xf]
  %v32 = vld [vmem:[%s2 + $0x18] sm:$0xf]
  %v33 = vld [vmem:[%s2 + $0x1c] sm:$0xf]
  %v34 = vld [vmem:[%s3] sm:$0x1]
  %v36 = vperm.slane %v34, 0
  %v40 = vunpack.c.l.b16 %v24
  %v41 = vunpack.c.l.b16 %v25
  %v42 = vpack.c.b16 %v41, %v40
  %v51 = vunpack.c.l.b16 %v26
  %v52 = vunpack.c.l.b16 %v27
  %v53 = vunpack.c.l.b16 %v28
  %v54 = vunpack.c.l.b16 %v29
  %v55 = vunpack.c.l.b16 %v30
  %v56 = vunpack.c.l.b16 %v31
  %v57 = vunpack.c.l.b16 %v32
  %v58 = vunpack.c.l.b16 %v33
  %v59 = vpack.c.b16 %v52, %v51
  %v60 = vpack.c.b16 %v54, %v53
  %v61 = vpack.c.b16 %v56, %v55
  %v62 = vpack.c.b16 %v58, %v57
  %vm67 = vcmask 523264
  %v69 = vsel %vm67, %v42, 0
  %71 = vmatpush.bf16.msra.mxu0 0
  %72 = vmatpush.bf16.msra.mxu0 0
  %73 = vmatpush.bf16.msra.mxu0 0
  %74 = vmatpush.bf16.msra.mxu0 0
  %75 = vmatpush.bf16.msra.mxu0 %v62
  %76 = vmatpush.bf16.msra.mxu0 %v61
  %77 = vmatpush.bf16.msra.mxu0 %v60
  %78 = vmatpush.bf16.msra.mxu0 %v59
  %79 = vmatmul.bf16.gmra.mxu0 %v69
  %v80 = vpop.f32.mrf.mxu0
  %v81 = vadd.f32 %v36, %v80
  %v82 = vpop.f32.mrf.mxu0
  %v83 = vadd.f32 %v36, %v82
  %84 = vdwg.mxu0
  %v85 = vld [vmem:[%s1] sm:$0xf]
  %v86 = vld [vmem:[%s1 + $0x4] sm:$0xf]
  %v87 = vunpack.c.l.bf16 %v85
  %v88 = vunpack.c.l.bf16 %v86
  %v89 = vadd.f32 %v81, %v87
  %v90 = vadd.f32 %v83, %v88
  %vm91 = vcmask 261120
  %v92 = vsel %vm91, %v89, 0.0
  %93 = vadd.xlane.f32.xlu0 %v92
  %v94 = vpop.xlane.xlu0 %93
  %v95 = vsel %vm91, %v90, 0.0
  %96 = vadd.xlane.f32.xlu0 %v95
  %v97 = vpop.xlane.xlu0 %96
  %v98 = vrcp.pop 32.0
  %v99 = vmul.f32 32.0, %v98
  %v100 = vsub.f32 1.0, %v99
  %v101 = vmul.f32 %v98, %v100
  %v102 = vadd.f32 %v98, %v101
  %vm103 = vweird.f32 %v98
  %v104 = vsel %vm103, %v98, %v102
  %v105 = vmul.f32 %v94, %v104
  %v106 = vmul.f32 %v97, %v104
  %v107 = vsub.f32 %v89, %v105
  %v108 = vsub.f32 %v90, %v106
  %v109 = vmul.f32 %v107, %v107
  %v110 = vmul.f32 %v108, %v108
  %v111 = vsel %vm91, %v109, 0.0
  %112 = vadd.xlane.f32.xlu0 %v111
  %v113 = vpop.xlane.xlu0 %112
  %v114 = vsel %vm91, %v110, 0.0
  %115 = vadd.xlane.f32.xlu0 %v114
  %v116 = vpop.xlane.xlu0 %115
  %v117 = vmul.f32 %v113, %v104
  %v118 = vmul.f32 %v116, %v104
  %v119 = vadd.f32 %v117, 1e-05
  %v120 = vadd.f32 %v118, 1e-05
  %v121 = vrsqrt.pop %v119
  %v122 = vmul.f32 %v121, %v119
  %v123 = vmul.f32 %v122, %v121
  %v124 = vmul.f32 0.5, %v123
  %v125 = vsub.f32 1.5, %v124
  %v126 = vmul.f32 %v121, %v125
  %vm127 = vweird.f32 %v119
  %vm128 = vweird.f32 %v121
  %vm129 = vmor %vm127, %vm128
  %v130 = vsel %vm129, %v121, %v126
  %v131 = vrsqrt.pop %v120
  %v132 = vmul.f32 %v131, %v120
  %v133 = vmul.f32 %v132, %v131
  %v134 = vmul.f32 0.5, %v133
  %v135 = vsub.f32 1.5, %v134
  %v136 = vmul.f32 %v131, %v135
  %vm137 = vweird.f32 %v120
  %vm138 = vweird.f32 %v131
  %vm139 = vmor %vm137, %vm138
  %v140 = vsel %vm139, %v131, %v136
  %v141 = vmul.f32 %v107, %v130
  %v142 = vmul.f32 %v108, %v140
  %v143 = vld [vmem:[%s4] sm:$0x1]
  %v145 = vperm.slane %v143, 0
  %v147 = vmul.f32 %v141, %v145
  %v148 = vmul.f32 %v142, %v145
  %v149 = vld [vmem:[%s5] sm:$0x1]
  %v151 = vperm.slane %v149, 0
  %v153 = vadd.f32 %v147, %v151
  %v154 = vadd.f32 %v148, %v151
  %v155 = vpack.c.bf16 %v153, %v153
  %v156 = vpack.c.bf16 %v154, %v154
  %vm157 = vcmask 257024
  %158 = vst.msk [vmem:[%s6] sm:$0xf] %vm157, %v155
  %159 = vst.msk [vmem:[%s6 + $0x4] sm:$0xf] %vm157, %v156
  // Predicated region
  $region26: #{encoder_forward.19} parent=0 // pred_check
    _
  $region27: #{encoder_forward.19} parent=0 // pred_check_branch
    %161 = sbr.rel (0) target = $region29
  $region28: #{encoder_forward.19} parent=0 // pred_region
    _
  $region29: #{encoder_forward.19} parent=0 // pred_fallthru
    _
  // Predicated region
  $region30: #{encoder_forward.19} parent=0 // pred_check
    _
  $region31: #{encoder_forward.19} parent=0 // pred_check_branch
    %163 = sbr.rel (0) target = $region33
  $region32: #{encoder_forward.19} parent=0 // pred_region
    _
  $region33: #{encoder_forward.19} parent=0 // pred_fallthru
    _

</llo_original>
